<compile_context>
chip_gen: v6e
topology: v6e:2x2x1
jax: 0.10.0
libtpu: 0.0.40
codegen_flags: <defaults>
</compile_context>

<pallas_src>
import math

import jax
import jax.numpy as jnp
from jax import lax
from jax.experimental import pallas as pl
from jax.experimental.pallas import tpu as pltpu


# ----------------------------- Pallas kernel ------------------------------- #
def _transformer_block_kernel(
    val_ref, key_ref, qry_ref, mask_ref,
    wq_ref, bq_ref, wk_ref, bk_ref, wv_ref, bv_ref, wo_ref, bo_ref,
    g1_ref, be1_ref, g2_ref, be2_ref,
    w1_ref, b1_ref, w2_ref, b2_ref,
    out_ref,
    *, eps: float = 1e-5,
):
    f32 = jnp.float32
    S, NE = val_ref.shape                 # (S, N*E) lane-packed inputs
    E = wq_ref.shape[0]
    N = NE // E
    heads, dh, _ = wo_ref.shape           # head-major output projection (heads, dh, E)
    mxu_dt = wq_ref.dtype                 # bf16 (or f32) — weights pre-cast by the wrapper

    # ---- gather batch-major rows: (S, N*E) lanes -> (N*S, E) rows.
    #      Lane slices + an 8-aligned sublane concat (free vreg stacking); batch is now
    #      fused into the matmul row dimension for every projection / FFN matmul. ----
    def rows(ref):
        return jnp.concatenate([ref[:, n * E:(n + 1) * E] for n in range(N)], axis=0)

    mha_q_in = rows(val_ref)   # forward arg `value`  -> MHA query
    mha_k_in = rows(key_ref)   # forward arg `key`    -> MHA key
    mha_v_in = rows(qry_ref)   # forward arg `query`  -> MHA value AND residual source

    # ---- fused input projections over the whole batch: (N*S, E) @ (E, E),
    #      bf16 MXU operands, f32 accumulation, f32 bias add.
    #      NOTE: 1/sqrt(dh) is already folded into (wq, bq) — no scaling here. ----
    q = jnp.dot(mha_q_in.astype(mxu_dt), wq_ref[...], preferred_element_type=f32) + bq_ref[...]
    k = jnp.dot(mha_k_in.astype(mxu_dt), wk_ref[...], preferred_element_type=f32) + bk_ref[...]
    v = jnp.dot(mha_v_in.astype(mxu_dt), wv_ref[...], preferred_element_type=f32) + bv_ref[...]

    # ---- head-batched attention: a single (N*heads)-batched einsum pair replaces the
    #      per-head Python loop of tiny matmuls. ----
    def split_heads(t):        # (N*S, E) -> (N*heads, S, dh), index = n*heads + h
        return jnp.stack(
            [t[n * S:(n + 1) * S, h * dh:(h + 1) * dh]
             for n in range(N) for h in range(heads)],
            axis=0)

    q3 = split_heads(q).astype(mxu_dt)
    k3 = split_heads(k).astype(mxu_dt)
    v3 = split_heads(v).astype(mxu_dt)

    s = jnp.einsum('bqd,bkd->bqk', q3, k3, preferred_element_type=f32)   # (N*heads, S, S)
    s = s + mask_ref[...]                          # one broadcast add over all batch*heads
    s = s - jnp.max(s, axis=-1, keepdims=True)     # stable softmax, f32
    p = jnp.exp(s)
    p = p * pl.reciprocal(jnp.sum(p, axis=-1, keepdims=True), approx=True)   # EUP vrcp
    o3 = jnp.einsum('bqk,bkd->bqd', p.astype(mxu_dt), v3,
                    preferred_element_type=f32)    # (N*heads, S, dh)

    # ---- output projection: accumulate head_h @ Wo[h] (head-major Wo) — no lane-minor
    #      concat of heads is ever materialized. ----
    attn = None
    for h in range(heads):
        o_h = jnp.concatenate([o3[n * heads + h] for n in range(N)], axis=0)   # (N*S, dh)
        contrib = jnp.dot(o_h.astype(mxu_dt), wo_ref[h], preferred_element_type=f32)
        attn = contrib if attn is None else attn + contrib
    attn = attn + bo_ref[...]

    # ---- residual + LayerNorm (f32 elementwise math, kept off bf16 for v5e) ----
    def layer_norm(t, g_ref, b_ref):
        mu = jnp.mean(t, axis=-1, keepdims=True)
        var = jnp.mean((t - mu) * (t - mu), axis=-1, keepdims=True)
        return (t - mu) * lax.rsqrt(var + eps) * g_ref[...] + b_ref[...]

    x = layer_norm(attn + mha_v_in, g1_ref, be1_ref)          # (N*S, E), f32

    # ---- feed-forward (batch-fused): Linear -> ReLU -> Linear, bf16 MXU / f32 acc ----
    h1 = jnp.dot(x.astype(mxu_dt), w1_ref[...], preferred_element_type=f32) + b1_ref[...]
    h1 = jnp.maximum(h1, 0.0)
    ff = jnp.dot(h1.astype(mxu_dt), w2_ref[...], preferred_element_type=f32) + b2_ref[...]

    # ---- residual + LayerNorm2, single full-block store in (S, N*E) layout ----
    y = layer_norm(ff + x, g2_ref, be2_ref)                   # (N*S, E)
    out_ref[...] = jnp.concatenate(
        [y[n * S:(n + 1) * S, :] for n in range(N)], axis=-1).astype(out_ref.dtype)
    # TODO(synk): dropout is implemented as identity (inference semantics); training-mode
    # stochastic dropout would use pltpu.prng_seed / pltpu.prng_random_bits.


# ------------------------------ wrappers ------------------------------------ #
def pack_params(params, heads, matmul_dtype=jnp.bfloat16):
    """One-time parameter packing (done outside the kernel / once at init):
       * fold 1/sqrt(dh) into (Wq, bq),
       * reshape Wo into head-major (heads, dh, E) so the kernel slices it with a
         leading-dim index (no packed-sublane slicing),
       * cast weight matrices to the MXU dtype (bf16 by default); biases / LayerNorm
         affine params stay f32."""
    E = params["wq"].shape[0]
    dh = E // heads
    scale = 1.0 / math.sqrt(dh)
    f32 = jnp.float32
    return {
        "wq": (params["wq"] * scale).astype(matmul_dtype),
        "bq": (params["bq"] * scale).astype(f32),
        "wk": params["wk"].astype(matmul_dtype), "bk": params["bk"].astype(f32),
        "wv": params["wv"].astype(matmul_dtype), "bv": params["bv"].astype(f32),
        "wo": params["wo"].reshape(heads, dh, E).astype(matmul_dtype),
        "bo": params["bo"].astype(f32),
        "g1": params["g1"].astype(f32), "be1": params["be1"].astype(f32),
        "g2": params["g2"].astype(f32), "be2": params["be2"].astype(f32),
        "w1": params["w1"].astype(matmul_dtype), "b1": params["b1"].astype(f32),
        "w2": params["w2"].astype(matmul_dtype), "b2": params["b2"].astype(f32),
    }


def transformer_block(value, key, query, mask, packed):
    """value/key/query: (S, N, E) seq-first (PyTorch MHA layout). mask: (S, S) additive float.
    `packed` comes from pack_params()."""
    S, N, E = value.shape

    # FREE row-major reshapes (no HBM transpose round trips): (S, N, E) -> (S, N*E)
    v2 = value.reshape(S, N * E)
    k2 = key.reshape(S, N * E)
    q2 = query.reshape(S, N * E)

    vmem_spec = pl.BlockSpec(memory_space=pltpu.MemorySpace.VMEM)
    n_inputs = 20

    out = pl.pallas_call(
        _transformer_block_kernel,
        out_shape=jax.ShapeDtypeStruct((S, N * E), value.dtype),
        in_specs=[vmem_spec] * n_inputs,
        out_specs=vmem_spec,
        # Everything (activations + weights) is resident exactly once in VMEM — no
        # double-buffering — which keeps this inside v7x's 64 MiB. At realistic sizes,
        # reintroduce a ("parallel",) grid over batch / row tiles and raise this limit.
        compiler_params=pltpu.CompilerParams(vmem_limit_bytes=32 * 1024 * 1024),
    )(
        v2, k2, q2, mask,
        packed["wq"], packed["bq"], packed["wk"], packed["bk"],
        packed["wv"], packed["bv"], packed["wo"], packed["bo"],
        packed["g1"], packed["be1"], packed["g2"], packed["be2"],
        packed["w1"], packed["b1"], packed["w2"], packed["b2"],
    )
    # free reshape back to the PyTorch seq-first layout
    return out.reshape(S, N, E)


def init_params(rng, feature_num, forward_expansion):
    """Deterministic synthetic parameters. Linear weights stored pre-transposed (in, out)."""
    E = feature_num
    F = forward_expansion * E
    ks = jax.random.split(rng, 12)
    s = 0.05
    return {
        "wq": s * jax.random.normal(ks[0], (E, E), jnp.float32),
        "wk": s * jax.random.normal(ks[1], (E, E), jnp.float32),
        "wv": s * jax.random.normal(ks[2], (E, E), jnp.float32),
        "wo": s * jax.random.normal(ks[3], (E, E), jnp.float32),
        "bq": s * jax.random.normal(ks[4], (1, E), jnp.float32),
        "bk": s * jax.random.normal(ks[5], (1, E), jnp.float32),
        "bv": s * jax.random.normal(ks[6], (1, E), jnp.float32),
        "bo": s * jax.random.normal(ks[7], (1, E), jnp.float32),
        "w1": s * jax.random.normal(ks[8], (E, F), jnp.float32),
        "b1": s * jax.random.normal(ks[9], (1, F), jnp.float32),
        "w2": s * jax.random.normal(ks[10], (F, E), jnp.float32),
        "b2": s * jax.random.normal(ks[11], (1, E), jnp.float32),
        # LayerNorm affine params (PyTorch default init: weight=1, bias=0)
        "g1": jnp.ones((1, E), jnp.float32), "be1": jnp.zeros((1, E), jnp.float32),
        "g2": jnp.ones((1, E), jnp.float32), "be2": jnp.zeros((1, E), jnp.float32),
    }


# ------------------------- pure-JAX reference ------------------------------ #
def _reference(value, key, query, mask, p, heads):
    S, N, E = value.shape
    dh = E // heads
    scale = 1.0 / math.sqrt(dh)

    def one_batch(v_in, k_in, q_in):   # each (S, E)
        q = v_in @ p["wq"] + p["bq"][0]
        k = k_in @ p["wk"] + p["bk"][0]
        v = q_in @ p["wv"] + p["bv"][0]
        outs = []
        for h in range(heads):
            qh, kh, vh = (t[:, h * dh:(h + 1) * dh] for t in (q, k, v))
            s = (qh * scale) @ kh.T + mask
            pmat = jax.nn.softmax(s, axis=-1)
            outs.append(pmat @ vh)
        attn = jnp.concatenate(outs, axis=-1) @ p["wo"] + p["bo"][0]

        def ln(t, g, b):
            mu = jnp.mean(t, -1, keepdims=True)
            var = jnp.mean((t - mu) ** 2, -1, keepdims=True)
            return (t - mu) * lax.rsqrt(var + 1e-5) * g + b

        x = ln(attn + q_in, p["g1"][0], p["be1"][0])
        ff = jnp.maximum(x @ p["w1"] + p["b1"][0], 0.0) @ p["w2"] + p["b2"][0]
        return ln(ff + x, p["g2"][0], p["be2"][0])

    vb, kb, qb = (jnp.transpose(t, (1, 0, 2)) for t in (value, key, query))
    out = jax.vmap(one_batch)(vb, kb, qb)
    return jnp.transpose(out, (1, 0, 2))


if __name__ == "__main__":
    # Small config: feature_num=32, heads=4, forward_expansion=2, seq=8, batch=2
    E, HEADS, FEXP = 32, 4, 2
    S, N = 8, 2

    root = jax.random.PRNGKey(0)
    k_p, k_v, k_k, k_q = jax.random.split(root, 4)

    params = init_params(k_p, E, FEXP)
    value = jax.random.normal(k_v, (S, N, E), jnp.float32)
    key = jax.random.normal(k_k, (S, N, E), jnp.float32)
    query = jax.random.normal(k_q, (S, N, E), jnp.float32)
    # additive float attn_mask (causal), same semantics as PyTorch float attn_mask
    idx = jnp.arange(S)
    mask = jnp.where(idx[None, :] > idx[:, None], -1e9, 0.0).astype(jnp.float32)

    ref = _reference(value, key, query, mask, params, HEADS)

    # ---- optimized path: bf16 MXU operands, f32 accumulation / softmax / LayerNorm ----
    packed_bf16 = pack_params(params, HEADS, jnp.bfloat16)
    out = transformer_block(value, key, query, mask, packed_bf16)
    out = jax.block_until_ready(out)
    assert out.shape == (S, N, E)
    # bf16 matmul operands + approximate EUP reciprocal -> relaxed tolerance
    assert jnp.allclose(out, ref, atol=3e-2, rtol=3e-2), "bf16 kernel mismatch vs reference"

    # ---- f32-MXU path: tight structural check of the same kernel code ----
    packed_f32 = pack_params(params, HEADS, jnp.float32)
    out_f32 = jax.block_until_ready(transformer_block(value, key, query, mask, packed_f32))
    assert jnp.allclose(out_f32, ref, atol=5e-3, rtol=5e-3), "f32 kernel mismatch vs reference"

    print("KERNEL_OK")
</pallas_src>

<mosaic_0001>
module attributes {stable_mosaic.version = 11 : i64} {
  func.func @_transformer_block_kernel(%arg0: memref<8x64xf32, #tpu.memory_space<vmem>>, %arg1: memref<8x64xf32, #tpu.memory_space<vmem>>, %arg2: memref<8x64xf32, #tpu.memory_space<vmem>>, %arg3: memref<8x8xf32, #tpu.memory_space<vmem>>, %arg4: memref<32x32xbf16, #tpu.memory_space<vmem>>, %arg5: memref<1x32xf32, #tpu.memory_space<vmem>>, %arg6: memref<32x32xbf16, #tpu.memory_space<vmem>>, %arg7: memref<1x32xf32, #tpu.memory_space<vmem>>, %arg8: memref<32x32xbf16, #tpu.memory_space<vmem>>, %arg9: memref<1x32xf32, #tpu.memory_space<vmem>>, %arg10: memref<4x8x32xbf16, #tpu.memory_space<vmem>>, %arg11: memref<1x32xf32, #tpu.memory_space<vmem>>, %arg12: memref<1x32xf32, #tpu.memory_space<vmem>>, %arg13: memref<1x32xf32, #tpu.memory_space<vmem>>, %arg14: memref<1x32xf32, #tpu.memory_space<vmem>>, %arg15: memref<1x32xf32, #tpu.memory_space<vmem>>, %arg16: memref<32x64xbf16, #tpu.memory_space<vmem>>, %arg17: memref<1x64xf32, #tpu.memory_space<vmem>>, %arg18: memref<64x32xbf16, #tpu.memory_space<vmem>>, %arg19: memref<1x32xf32, #tpu.memory_space<vmem>>, %arg20: memref<8x64xf32, #tpu.memory_space<vmem>>) attributes {dimension_semantics = [], scalar_prefetch = 0 : i64, scratch_operands = 0 : i64, tpu.core_type = #tpu.core_type<tc>} {
    %c0 = arith.constant 0 : index
    %c0_0 = arith.constant 0 : index
    %0 = vector.load %arg0[%c0, %c0_0] : memref<8x64xf32, #tpu.memory_space<vmem>>, vector<8x32xf32>
    %c0_1 = arith.constant 0 : index
    %c32 = arith.constant 32 : index
    %1 = vector.load %arg0[%c0_1, %c32] : memref<8x64xf32, #tpu.memory_space<vmem>>, vector<8x32xf32>
    %2 = tpu.concatenate %0, %1 in 0 : vector<8x32xf32>, vector<8x32xf32> -> vector<16x32xf32>
    %c0_2 = arith.constant 0 : index
    %c0_3 = arith.constant 0 : index
    %3 = vector.load %arg1[%c0_2, %c0_3] : memref<8x64xf32, #tpu.memory_space<vmem>>, vector<8x32xf32>
    %c0_4 = arith.constant 0 : index
    %c32_5 = arith.constant 32 : index
    %4 = vector.load %arg1[%c0_4, %c32_5] : memref<8x64xf32, #tpu.memory_space<vmem>>, vector<8x32xf32>
    %5 = tpu.concatenate %3, %4 in 0 : vector<8x32xf32>, vector<8x32xf32> -> vector<16x32xf32>
    %c0_6 = arith.constant 0 : index
    %c0_7 = arith.constant 0 : index
    %6 = vector.load %arg2[%c0_6, %c0_7] : memref<8x64xf32, #tpu.memory_space<vmem>>, vector<8x32xf32>
    %c0_8 = arith.constant 0 : index
    %c32_9 = arith.constant 32 : index
    %7 = vector.load %arg2[%c0_8, %c32_9] : memref<8x64xf32, #tpu.memory_space<vmem>>, vector<8x32xf32>
    %8 = tpu.concatenate %6, %7 in 0 : vector<8x32xf32>, vector<8x32xf32> -> vector<16x32xf32>
    %9 = arith.truncf %2 : vector<16x32xf32> to vector<16x32xbf16>
    %c0_10 = arith.constant 0 : index
    %c0_11 = arith.constant 0 : index
    %10 = vector.load %arg4[%c0_10, %c0_11] : memref<32x32xbf16, #tpu.memory_space<vmem>>, vector<32x32xbf16>
    %cst = arith.constant dense<0.000000e+00> : vector<16x32xf32>
    %11 = tpu.matmul %9, %10, %cst {dimension_numbers = #tpu.dot_dimension_numbers<[1], [0], [0], [1], [0, 0, 1, 1], [], []>} : vector<16x32xbf16>, vector<32x32xbf16>, vector<16x32xf32> -> vector<16x32xf32>
    %c0_12 = arith.constant 0 : index
    %c0_13 = arith.constant 0 : index
    %12 = vector.load %arg5[%c0_12, %c0_13] : memref<1x32xf32, #tpu.memory_space<vmem>>, vector<1x32xf32>
    %13 = vector.broadcast %12 : vector<1x32xf32> to vector<16x32xf32>
    %14 = arith.addf %11, %13 : vector<16x32xf32>
    %15 = arith.truncf %5 : vector<16x32xf32> to vector<16x32xbf16>
    %c0_14 = arith.constant 0 : index
    %c0_15 = arith.constant 0 : index
    %16 = vector.load %arg6[%c0_14, %c0_15] : memref<32x32xbf16, #tpu.memory_space<vmem>>, vector<32x32xbf16>
    %cst_16 = arith.constant dense<0.000000e+00> : vector<16x32xf32>
    %17 = tpu.matmul %15, %16, %cst_16 {dimension_numbers = #tpu.dot_dimension_numbers<[1], [0], [0], [1], [0, 0, 1, 1], [], []>} : vector<16x32xbf16>, vector<32x32xbf16>, vector<16x32xf32> -> vector<16x32xf32>
    %c0_17 = arith.constant 0 : index
    %c0_18 = arith.constant 0 : index
    %18 = vector.load %arg7[%c0_17, %c0_18] : memref<1x32xf32, #tpu.memory_space<vmem>>, vector<1x32xf32>
    %19 = vector.broadcast %18 : vector<1x32xf32> to vector<16x32xf32>
    %20 = arith.addf %17, %19 : vector<16x32xf32>
    %21 = arith.truncf %8 : vector<16x32xf32> to vector<16x32xbf16>
    %c0_19 = arith.constant 0 : index
    %c0_20 = arith.constant 0 : index
    %22 = vector.load %arg8[%c0_19, %c0_20] : memref<32x32xbf16, #tpu.memory_space<vmem>>, vector<32x32xbf16>
    %cst_21 = arith.constant dense<0.000000e+00> : vector<16x32xf32>
    %23 = tpu.matmul %21, %22, %cst_21 {dimension_numbers = #tpu.dot_dimension_numbers<[1], [0], [0], [1], [0, 0, 1, 1], [], []>} : vector<16x32xbf16>, vector<32x32xbf16>, vector<16x32xf32> -> vector<16x32xf32>
    %c0_22 = arith.constant 0 : index
    %c0_23 = arith.constant 0 : index
    %24 = vector.load %arg9[%c0_22, %c0_23] : memref<1x32xf32, #tpu.memory_space<vmem>>, vector<1x32xf32>
    %25 = vector.broadcast %24 : vector<1x32xf32> to vector<16x32xf32>
    %26 = arith.addf %23, %25 : vector<16x32xf32>
    %27 = vector.extract_strided_slice %14 {offsets = [0, 0], sizes = [8, 8], strides = [1, 1]} : vector<16x32xf32> to vector<8x8xf32>
    %28 = vector.extract_strided_slice %14 {offsets = [0, 8], sizes = [8, 8], strides = [1, 1]} : vector<16x32xf32> to vector<8x8xf32>
    %29 = vector.extract_strided_slice %14 {offsets = [0, 16], sizes = [8, 8], strides = [1, 1]} : vector<16x32xf32> to vector<8x8xf32>
    %30 = vector.extract_strided_slice %14 {offsets = [0, 24], sizes = [8, 8], strides = [1, 1]} : vector<16x32xf32> to vector<8x8xf32>
    %31 = vector.extract_strided_slice %14 {offsets = [8, 0], sizes = [8, 8], strides = [1, 1]} : vector<16x32xf32> to vector<8x8xf32>
    %32 = vector.extract_strided_slice %14 {offsets = [8, 8], sizes = [8, 8], strides = [1, 1]} : vector<16x32xf32> to vector<8x8xf32>
    %33 = vector.extract_strided_slice %14 {offsets = [8, 16], sizes = [8, 8], strides = [1, 1]} : vector<16x32xf32> to vector<8x8xf32>
    %34 = vector.extract_strided_slice %14 {offsets = [8, 24], sizes = [8, 8], strides = [1, 1]} : vector<16x32xf32> to vector<8x8xf32>
    %35 = vector.shape_cast %27 : vector<8x8xf32> to vector<1x8x8xf32>
    %36 = vector.shape_cast %28 : vector<8x8xf32> to vector<1x8x8xf32>
    %37 = vector.shape_cast %29 : vector<8x8xf32> to vector<1x8x8xf32>
    %38 = vector.shape_cast %30 : vector<8x8xf32> to vector<1x8x8xf32>
    %39 = vector.shape_cast %31 : vector<8x8xf32> to vector<1x8x8xf32>
    %40 = vector.shape_cast %32 : vector<8x8xf32> to vector<1x8x8xf32>
    %41 = vector.shape_cast %33 : vector<8x8xf32> to vector<1x8x8xf32>
    %42 = vector.shape_cast %34 : vector<8x8xf32> to vector<1x8x8xf32>
    %43 = tpu.concatenate %35, %36, %37, %38, %39, %40, %41, %42 in 0 : vector<1x8x8xf32>, vector<1x8x8xf32>, vector<1x8x8xf32>, vector<1x8x8xf32>, vector<1x8x8xf32>, vector<1x8x8xf32>, vector<1x8x8xf32>, vector<1x8x8xf32> -> vector<8x8x8xf32>
    %44 = arith.truncf %43 : vector<8x8x8xf32> to vector<8x8x8xbf16>
    %45 = vector.extract_strided_slice %20 {offsets = [0, 0], sizes = [8, 8], strides = [1, 1]} : vector<16x32xf32> to vector<8x8xf32>
    %46 = vector.extract_strided_slice %20 {offsets = [0, 8], sizes = [8, 8], strides = [1, 1]} : vector<16x32xf32> to vector<8x8xf32>
    %47 = vector.extract_strided_slice %20 {offsets = [0, 16], sizes = [8, 8], strides = [1, 1]} : vector<16x32xf32> to vector<8x8xf32>
    %48 = vector.extract_strided_slice %20 {offsets = [0, 24], sizes = [8, 8], strides = [1, 1]} : vector<16x32xf32> to vector<8x8xf32>
    %49 = vector.extract_strided_slice %20 {offsets = [8, 0], sizes = [8, 8], strides = [1, 1]} : vector<16x32xf32> to vector<8x8xf32>
    %50 = vector.extract_strided_slice %20 {offsets = [8, 8], sizes = [8, 8], strides = [1, 1]} : vector<16x32xf32> to vector<8x8xf32>
    %51 = vector.extract_strided_slice %20 {offsets = [8, 16], sizes = [8, 8], strides = [1, 1]} : vector<16x32xf32> to vector<8x8xf32>
    %52 = vector.extract_strided_slice %20 {offsets = [8, 24], sizes = [8, 8], strides = [1, 1]} : vector<16x32xf32> to vector<8x8xf32>
    %53 = vector.shape_cast %45 : vector<8x8xf32> to vector<1x8x8xf32>
    %54 = vector.shape_cast %46 : vector<8x8xf32> to vector<1x8x8xf32>
    %55 = vector.shape_cast %47 : vector<8x8xf32> to vector<1x8x8xf32>
    %56 = vector.shape_cast %48 : vector<8x8xf32> to vector<1x8x8xf32>
    %57 = vector.shape_cast %49 : vector<8x8xf32> to vector<1x8x8xf32>
    %58 = vector.shape_cast %50 : vector<8x8xf32> to vector<1x8x8xf32>
    %59 = vector.shape_cast %51 : vector<8x8xf32> to vector<1x8x8xf32>
    %60 = vector.shape_cast %52 : vector<8x8xf32> to vector<1x8x8xf32>
    %61 = tpu.concatenate %53, %54, %55, %56, %57, %58, %59, %60 in 0 : vector<1x8x8xf32>, vector<1x8x8xf32>, vector<1x8x8xf32>, vector<1x8x8xf32>, vector<1x8x8xf32>, vector<1x8x8xf32>, vector<1x8x8xf32>, vector<1x8x8xf32> -> vector<8x8x8xf32>
    %62 = arith.truncf %61 : vector<8x8x8xf32> to vector<8x8x8xbf16>
    %63 = vector.extract_strided_slice %26 {offsets = [0, 0], sizes = [8, 8], strides = [1, 1]} : vector<16x32xf32> to vector<8x8xf32>
    %64 = vector.extract_strided_slice %26 {offsets = [0, 8], sizes = [8, 8], strides = [1, 1]} : vector<16x32xf32> to vector<8x8xf32>
    %65 = vector.extract_strided_slice %26 {offsets = [0, 16], sizes = [8, 8], strides = [1, 1]} : vector<16x32xf32> to vector<8x8xf32>
    %66 = vector.extract_strided_slice %26 {offsets = [0, 24], sizes = [8, 8], strides = [1, 1]} : vector<16x32xf32> to vector<8x8xf32>
    %67 = vector.extract_strided_slice %26 {offsets = [8, 0], sizes = [8, 8], strides = [1, 1]} : vector<16x32xf32> to vector<8x8xf32>
    %68 = vector.extract_strided_slice %26 {offsets = [8, 8], sizes = [8, 8], strides = [1, 1]} : vector<16x32xf32> to vector<8x8xf32>
    %69 = vector.extract_strided_slice %26 {offsets = [8, 16], sizes = [8, 8], strides = [1, 1]} : vector<16x32xf32> to vector<8x8xf32>
    %70 = vector.extract_strided_slice %26 {offsets = [8, 24], sizes = [8, 8], strides = [1, 1]} : vector<16x32xf32> to vector<8x8xf32>
    %71 = vector.shape_cast %63 : vector<8x8xf32> to vector<1x8x8xf32>
    %72 = vector.shape_cast %64 : vector<8x8xf32> to vector<1x8x8xf32>
    %73 = vector.shape_cast %65 : vector<8x8xf32> to vector<1x8x8xf32>
    %74 = vector.shape_cast %66 : vector<8x8xf32> to vector<1x8x8xf32>
    %75 = vector.shape_cast %67 : vector<8x8xf32> to vector<1x8x8xf32>
    %76 = vector.shape_cast %68 : vector<8x8xf32> to vector<1x8x8xf32>
    %77 = vector.shape_cast %69 : vector<8x8xf32> to vector<1x8x8xf32>
    %78 = vector.shape_cast %70 : vector<8x8xf32> to vector<1x8x8xf32>
    %79 = tpu.concatenate %71, %72, %73, %74, %75, %76, %77, %78 in 0 : vector<1x8x8xf32>, vector<1x8x8xf32>, vector<1x8x8xf32>, vector<1x8x8xf32>, vector<1x8x8xf32>, vector<1x8x8xf32>, vector<1x8x8xf32>, vector<1x8x8xf32> -> vector<8x8x8xf32>
    %80 = arith.truncf %79 : vector<8x8x8xf32> to vector<8x8x8xbf16>
    "tpu.trace_start"() <{level = 10 : i32, message = "bqd,bkd->bqk"}> : () -> ()
    %cst_24 = arith.constant dense<0.000000e+00> : vector<8x8x8xf32>
    %81 = tpu.matmul %44, %62, %cst_24 {dimension_numbers = #tpu.dot_dimension_numbers<[2], [2], [1], [1], [0, 0, 0, 1, 1, 1], [0], [0]>} : vector<8x8x8xbf16>, vector<8x8x8xbf16>, vector<8x8x8xf32> -> vector<8x8x8xf32>
    "tpu.trace_stop"() : () -> ()
    %c0_25 = arith.constant 0 : index
    %c0_26 = arith.constant 0 : index
    %82 = vector.load %arg3[%c0_25, %c0_26] : memref<8x8xf32, #tpu.memory_space<vmem>>, vector<8x8xf32>
    %83 = vector.shape_cast %82 : vector<8x8xf32> to vector<1x8x8xf32>
    %84 = vector.broadcast %83 : vector<1x8x8xf32> to vector<8x8x8xf32>
    %85 = arith.addf %81, %84 : vector<8x8x8xf32>
    %cst_27 = arith.constant dense<0xFF800000> : vector<8x8xf32>
    %86 = vector.multi_reduction <maximumf>, %85, %cst_27 [2] : vector<8x8x8xf32> to vector<8x8xf32>
    %87 = vector.shape_cast %86 : vector<8x8xf32> to vector<8x8x1xf32>
    %88 = vector.broadcast %87 : vector<8x8x1xf32> to vector<8x8x8xf32>
    %89 = arith.subf %85, %88 : vector<8x8x8xf32>
    %90 = math.exp %89 : vector<8x8x8xf32>
    %cst_28 = arith.constant dense<0.000000e+00> : vector<8x8xf32>
    %91 = vector.multi_reduction <add>, %90, %cst_28 [2] : vector<8x8x8xf32> to vector<8x8xf32>
    %92 = vector.shape_cast %91 : vector<8x8xf32> to vector<8x8x1xf32>
    %93 = tpu.reciprocal %92 {approx = true} : vector<8x8x1xf32> -> vector<8x8x1xf32>
    %94 = vector.broadcast %93 : vector<8x8x1xf32> to vector<8x8x8xf32>
    %95 = arith.mulf %90, %94 : vector<8x8x8xf32>
    %96 = arith.truncf %95 : vector<8x8x8xf32> to vector<8x8x8xbf16>
    "tpu.trace_start"() <{level = 10 : i32, message = "bqk,bkd->bqd"}> : () -> ()
    %cst_29 = arith.constant dense<0.000000e+00> : vector<8x8x8xf32>
    %97 = tpu.matmul %96, %80, %cst_29 {dimension_numbers = #tpu.dot_dimension_numbers<[2], [1], [1], [2], [0, 0, 0, 1, 1, 2], [0], [0]>} : vector<8x8x8xbf16>, vector<8x8x8xbf16>, vector<8x8x8xf32> -> vector<8x8x8xf32>
    "tpu.trace_stop"() : () -> ()
    %98 = vector.extract_strided_slice %97 {offsets = [0, 0, 0], sizes = [1, 8, 8], strides = [1, 1, 1]} : vector<8x8x8xf32> to vector<1x8x8xf32>
    %99 = vector.shape_cast %98 : vector<1x8x8xf32> to vector<8x8xf32>
    %100 = vector.extract_strided_slice %97 {offsets = [4, 0, 0], sizes = [1, 8, 8], strides = [1, 1, 1]} : vector<8x8x8xf32> to vector<1x8x8xf32>
    %101 = vector.shape_cast %100 : vector<1x8x8xf32> to vector<8x8xf32>
    %102 = tpu.concatenate %99, %101 in 0 : vector<8x8xf32>, vector<8x8xf32> -> vector<16x8xf32>
    %103 = arith.truncf %102 : vector<16x8xf32> to vector<16x8xbf16>
    %c0_30 = arith.constant 0 : index
    %c0_31 = arith.constant 0 : index
    %c0_32 = arith.constant 0 : index
    %104 = vector.load %arg10[%c0_30, %c0_31, %c0_32] : memref<4x8x32xbf16, #tpu.memory_space<vmem>>, vector<1x8x32xbf16>
    %105 = vector.shape_cast %104 : vector<1x8x32xbf16> to vector<8x32xbf16>
    %cst_33 = arith.constant dense<0.000000e+00> : vector<16x32xf32>
    %106 = tpu.matmul %103, %105, %cst_33 {dimension_numbers = #tpu.dot_dimension_numbers<[1], [0], [0], [1], [0, 0, 1, 1], [], []>} : vector<16x8xbf16>, vector<8x32xbf16>, vector<16x32xf32> -> vector<16x32xf32>
    %107 = vector.extract_strided_slice %97 {offsets = [1, 0, 0], sizes = [1, 8, 8], strides = [1, 1, 1]} : vector<8x8x8xf32> to vector<1x8x8xf32>
    %108 = vector.shape_cast %107 : vector<1x8x8xf32> to vector<8x8xf32>
    %109 = vector.extract_strided_slice %97 {offsets = [5, 0, 0], sizes = [1, 8, 8], strides = [1, 1, 1]} : vector<8x8x8xf32> to vector<1x8x8xf32>
    %110 = vector.shape_cast %109 : vector<1x8x8xf32> to vector<8x8xf32>
    %111 = tpu.concatenate %108, %110 in 0 : vector<8x8xf32>, vector<8x8xf32> -> vector<16x8xf32>
    %112 = arith.truncf %111 : vector<16x8xf32> to vector<16x8xbf16>
    %c1 = arith.constant 1 : index
    %c0_34 = arith.constant 0 : index
    %c0_35 = arith.constant 0 : index
    %113 = vector.load %arg10[%c1, %c0_34, %c0_35] : memref<4x8x32xbf16, #tpu.memory_space<vmem>>, vector<1x8x32xbf16>
    %114 = vector.shape_cast %113 : vector<1x8x32xbf16> to vector<8x32xbf16>
    %cst_36 = arith.constant dense<0.000000e+00> : vector<16x32xf32>
    %115 = tpu.matmul %112, %114, %cst_36 {dimension_numbers = #tpu.dot_dimension_numbers<[1], [0], [0], [1], [0, 0, 1, 1], [], []>} : vector<16x8xbf16>, vector<8x32xbf16>, vector<16x32xf32> -> vector<16x32xf32>
    %116 = arith.addf %106, %115 : vector<16x32xf32>
    %117 = vector.extract_strided_slice %97 {offsets = [2, 0, 0], sizes = [1, 8, 8], strides = [1, 1, 1]} : vector<8x8x8xf32> to vector<1x8x8xf32>
    %118 = vector.shape_cast %117 : vector<1x8x8xf32> to vector<8x8xf32>
    %119 = vector.extract_strided_slice %97 {offsets = [6, 0, 0], sizes = [1, 8, 8], strides = [1, 1, 1]} : vector<8x8x8xf32> to vector<1x8x8xf32>
    %120 = vector.shape_cast %119 : vector<1x8x8xf32> to vector<8x8xf32>
    %121 = tpu.concatenate %118, %120 in 0 : vector<8x8xf32>, vector<8x8xf32> -> vector<16x8xf32>
    %122 = arith.truncf %121 : vector<16x8xf32> to vector<16x8xbf16>
    %c2 = arith.constant 2 : index
    %c0_37 = arith.constant 0 : index
    %c0_38 = arith.constant 0 : index
    %123 = vector.load %arg10[%c2, %c0_37, %c0_38] : memref<4x8x32xbf16, #tpu.memory_space<vmem>>, vector<1x8x32xbf16>
    %124 = vector.shape_cast %123 : vector<1x8x32xbf16> to vector<8x32xbf16>
    %cst_39 = arith.constant dense<0.000000e+00> : vector<16x32xf32>
    %125 = tpu.matmul %122, %124, %cst_39 {dimension_numbers = #tpu.dot_dimension_numbers<[1], [0], [0], [1], [0, 0, 1, 1], [], []>} : vector<16x8xbf16>, vector<8x32xbf16>, vector<16x32xf32> -> vector<16x32xf32>
    %126 = arith.addf %116, %125 : vector<16x32xf32>
    %127 = vector.extract_strided_slice %97 {offsets = [3, 0, 0], sizes = [1, 8, 8], strides = [1, 1, 1]} : vector<8x8x8xf32> to vector<1x8x8xf32>
    %128 = vector.shape_cast %127 : vector<1x8x8xf32> to vector<8x8xf32>
    %129 = vector.extract_strided_slice %97 {offsets = [7, 0, 0], sizes = [1, 8, 8], strides = [1, 1, 1]} : vector<8x8x8xf32> to vector<1x8x8xf32>
    %130 = vector.shape_cast %129 : vector<1x8x8xf32> to vector<8x8xf32>
    %131 = tpu.concatenate %128, %130 in 0 : vector<8x8xf32>, vector<8x8xf32> -> vector<16x8xf32>
    %132 = arith.truncf %131 : vector<16x8xf32> to vector<16x8xbf16>
    %c3 = arith.constant 3 : index
    %c0_40 = arith.constant 0 : index
    %c0_41 = arith.constant 0 : index
    %133 = vector.load %arg10[%c3, %c0_40, %c0_41] : memref<4x8x32xbf16, #tpu.memory_space<vmem>>, vector<1x8x32xbf16>
    %134 = vector.shape_cast %133 : vector<1x8x32xbf16> to vector<8x32xbf16>
    %cst_42 = arith.constant dense<0.000000e+00> : vector<16x32xf32>
    %135 = tpu.matmul %132, %134, %cst_42 {dimension_numbers = #tpu.dot_dimension_numbers<[1], [0], [0], [1], [0, 0, 1, 1], [], []>} : vector<16x8xbf16>, vector<8x32xbf16>, vector<16x32xf32> -> vector<16x32xf32>
    %136 = arith.addf %126, %135 : vector<16x32xf32>
    %c0_43 = arith.constant 0 : index
    %c0_44 = arith.constant 0 : index
    %137 = vector.load %arg11[%c0_43, %c0_44] : memref<1x32xf32, #tpu.memory_space<vmem>>, vector<1x32xf32>
    %138 = vector.broadcast %137 : vector<1x32xf32> to vector<16x32xf32>
    %139 = arith.addf %136, %138 : vector<16x32xf32>
    %140 = arith.addf %139, %8 : vector<16x32xf32>
    %cst_45 = arith.constant dense<0.000000e+00> : vector<16xf32>
    %141 = vector.multi_reduction <add>, %140, %cst_45 [1] : vector<16x32xf32> to vector<16xf32>
    %142 = vector.shape_cast %141 : vector<16xf32> to vector<16x1xf32>
    %cst_46 = arith.constant 3.200000e+01 : f32
    %143 = vector.broadcast %cst_46 : f32 to vector<16x1xf32>
    %144 = arith.divf %142, %143 : vector<16x1xf32>
    %145 = vector.broadcast %144 : vector<16x1xf32> to vector<16x32xf32>
    %146 = arith.subf %140, %145 : vector<16x32xf32>
    %147 = vector.broadcast %144 : vector<16x1xf32> to vector<16x32xf32>
    %148 = arith.subf %140, %147 : vector<16x32xf32>
    %149 = arith.mulf %146, %148 : vector<16x32xf32>
    %cst_47 = arith.constant dense<0.000000e+00> : vector<16xf32>
    %150 = vector.multi_reduction <add>, %149, %cst_47 [1] : vector<16x32xf32> to vector<16xf32>
    %151 = vector.shape_cast %150 : vector<16xf32> to vector<16x1xf32>
    %cst_48 = arith.constant 3.200000e+01 : f32
    %152 = vector.broadcast %cst_48 : f32 to vector<16x1xf32>
    %153 = arith.divf %151, %152 : vector<16x1xf32>
    %154 = vector.broadcast %144 : vector<16x1xf32> to vector<16x32xf32>
    %155 = arith.subf %140, %154 : vector<16x32xf32>
    %cst_49 = arith.constant 9.99999974E-6 : f32
    %156 = vector.broadcast %cst_49 : f32 to vector<16x1xf32>
    %157 = arith.addf %153, %156 : vector<16x1xf32>
    %158 = math.rsqrt %157 : vector<16x1xf32>
    %159 = vector.broadcast %158 : vector<16x1xf32> to vector<16x32xf32>
    %160 = arith.mulf %155, %159 : vector<16x32xf32>
    %c0_50 = arith.constant 0 : index
    %c0_51 = arith.constant 0 : index
    %161 = vector.load %arg12[%c0_50, %c0_51] : memref<1x32xf32, #tpu.memory_space<vmem>>, vector<1x32xf32>
    %162 = vector.broadcast %161 : vector<1x32xf32> to vector<16x32xf32>
    %163 = arith.mulf %160, %162 : vector<16x32xf32>
    %c0_52 = arith.constant 0 : index
    %c0_53 = arith.constant 0 : index
    %164 = vector.load %arg13[%c0_52, %c0_53] : memref<1x32xf32, #tpu.memory_space<vmem>>, vector<1x32xf32>
    %165 = vector.broadcast %164 : vector<1x32xf32> to vector<16x32xf32>
    %166 = arith.addf %163, %165 : vector<16x32xf32>
    %167 = arith.truncf %166 : vector<16x32xf32> to vector<16x32xbf16>
    %c0_54 = arith.constant 0 : index
    %c0_55 = arith.constant 0 : index
    %168 = vector.load %arg16[%c0_54, %c0_55] : memref<32x64xbf16, #tpu.memory_space<vmem>>, vector<32x64xbf16>
    %cst_56 = arith.constant dense<0.000000e+00> : vector<16x64xf32>
    %169 = tpu.matmul %167, %168, %cst_56 {dimension_numbers = #tpu.dot_dimension_numbers<[1], [0], [0], [1], [0, 0, 1, 1], [], []>} : vector<16x32xbf16>, vector<32x64xbf16>, vector<16x64xf32> -> vector<16x64xf32>
    %c0_57 = arith.constant 0 : index
    %c0_58 = arith.constant 0 : index
    %170 = vector.load %arg17[%c0_57, %c0_58] : memref<1x64xf32, #tpu.memory_space<vmem>>, vector<1x64xf32>
    %171 = vector.broadcast %170 : vector<1x64xf32> to vector<16x64xf32>
    %172 = arith.addf %169, %171 : vector<16x64xf32>
    %cst_59 = arith.constant 0.000000e+00 : f32
    %173 = vector.broadcast %cst_59 : f32 to vector<16x64xf32>
    %174 = arith.maximumf %172, %173 : vector<16x64xf32>
    %175 = arith.truncf %174 : vector<16x64xf32> to vector<16x64xbf16>
    %c0_60 = arith.constant 0 : index
    %c0_61 = arith.constant 0 : index
    %176 = vector.load %arg18[%c0_60, %c0_61] : memref<64x32xbf16, #tpu.memory_space<vmem>>, vector<64x32xbf16>
    %cst_62 = arith.constant dense<0.000000e+00> : vector<16x32xf32>
    %177 = tpu.matmul %175, %176, %cst_62 {dimension_numbers = #tpu.dot_dimension_numbers<[1], [0], [0], [1], [0, 0, 1, 1], [], []>} : vector<16x64xbf16>, vector<64x32xbf16>, vector<16x32xf32> -> vector<16x32xf32>
    %c0_63 = arith.constant 0 : index
    %c0_64 = arith.constant 0 : index
    %178 = vector.load %arg19[%c0_63, %c0_64] : memref<1x32xf32, #tpu.memory_space<vmem>>, vector<1x32xf32>
    %179 = vector.broadcast %178 : vector<1x32xf32> to vector<16x32xf32>
    %180 = arith.addf %177, %179 : vector<16x32xf32>
    %181 = arith.addf %180, %166 : vector<16x32xf32>
    %cst_65 = arith.constant dense<0.000000e+00> : vector<16xf32>
    %182 = vector.multi_reduction <add>, %181, %cst_65 [1] : vector<16x32xf32> to vector<16xf32>
    %183 = vector.shape_cast %182 : vector<16xf32> to vector<16x1xf32>
    %cst_66 = arith.constant 3.200000e+01 : f32
    %184 = vector.broadcast %cst_66 : f32 to vector<16x1xf32>
    %185 = arith.divf %183, %184 : vector<16x1xf32>
    %186 = vector.broadcast %185 : vector<16x1xf32> to vector<16x32xf32>
    %187 = arith.subf %181, %186 : vector<16x32xf32>
    %188 = vector.broadcast %185 : vector<16x1xf32> to vector<16x32xf32>
    %189 = arith.subf %181, %188 : vector<16x32xf32>
    %190 = arith.mulf %187, %189 : vector<16x32xf32>
    %cst_67 = arith.constant dense<0.000000e+00> : vector<16xf32>
    %191 = vector.multi_reduction <add>, %190, %cst_67 [1] : vector<16x32xf32> to vector<16xf32>
    %192 = vector.shape_cast %191 : vector<16xf32> to vector<16x1xf32>
    %cst_68 = arith.constant 3.200000e+01 : f32
    %193 = vector.broadcast %cst_68 : f32 to vector<16x1xf32>
    %194 = arith.divf %192, %193 : vector<16x1xf32>
    %195 = vector.broadcast %185 : vector<16x1xf32> to vector<16x32xf32>
    %196 = arith.subf %181, %195 : vector<16x32xf32>
    %cst_69 = arith.constant 9.99999974E-6 : f32
    %197 = vector.broadcast %cst_69 : f32 to vector<16x1xf32>
    %198 = arith.addf %194, %197 : vector<16x1xf32>
    %199 = math.rsqrt %198 : vector<16x1xf32>
    %200 = vector.broadcast %199 : vector<16x1xf32> to vector<16x32xf32>
    %201 = arith.mulf %196, %200 : vector<16x32xf32>
    %c0_70 = arith.constant 0 : index
    %c0_71 = arith.constant 0 : index
    %202 = vector.load %arg14[%c0_70, %c0_71] : memref<1x32xf32, #tpu.memory_space<vmem>>, vector<1x32xf32>
    %203 = vector.broadcast %202 : vector<1x32xf32> to vector<16x32xf32>
    %204 = arith.mulf %201, %203 : vector<16x32xf32>
    %c0_72 = arith.constant 0 : index
    %c0_73 = arith.constant 0 : index
    %205 = vector.load %arg15[%c0_72, %c0_73] : memref<1x32xf32, #tpu.memory_space<vmem>>, vector<1x32xf32>
    %206 = vector.broadcast %205 : vector<1x32xf32> to vector<16x32xf32>
    %207 = arith.addf %204, %206 : vector<16x32xf32>
    %208 = vector.extract_strided_slice %207 {offsets = [0, 0], sizes = [8, 32], strides = [1, 1]} : vector<16x32xf32> to vector<8x32xf32>
    %209 = vector.extract_strided_slice %207 {offsets = [8, 0], sizes = [8, 32], strides = [1, 1]} : vector<16x32xf32> to vector<8x32xf32>
    %210 = tpu.concatenate %208, %209 in 1 : vector<8x32xf32>, vector<8x32xf32> -> vector<8x64xf32>
    %c0_74 = arith.constant 0 : index
    %c0_75 = arith.constant 0 : index
    %211 = vector.load %arg20[%c0_74, %c0_75] : memref<8x64xf32, #tpu.memory_space<vmem>>, vector<8x64xf32>
    tpu.vector_store %arg20[%c0_74, %c0_75], %210 {strides = array<i32>} : memref<8x64xf32, #tpu.memory_space<vmem>>, vector<8x64xf32>,
    return
  }
}

</mosaic_0001>

<llo_original>
// kernel: tpu_custom_call.1
$region0: #{tpu_custom_call.1}
  #allocation0 [shape = 'u32[]', space=smem, size = 0x4, offset = 0x4, fixed_abs, tag = 'smem constant byte address 0x4 - core index']
  #allocation1 [shape = 'u32[144,128]{1,0:T(1,128)}', space=vmem, size = 0x12000, scoped, tag = 'internal scratch']
  %s0 = inlined_call_operand.hbm [shape: f32[8,64], index: 0, kind: input, shape index: {}]
  %s1 = inlined_call_operand.hbm [shape: f32[8,64], index: 1, kind: input, shape index: {}]
  %s2 = inlined_call_operand.hbm [shape: f32[8,64], index: 2, kind: input, shape index: {}]
  %s3 = inlined_call_operand.hbm [shape: f32[8,8], index: 3, kind: input, shape index: {}]
  %s4 = inlined_call_operand.vmem [shape: bf16[32,32], index: 4, kind: input, shape index: {}]
  %s5 = inlined_call_operand.hbm [shape: f32[1,32], index: 5, kind: input, shape index: {}]
  %s6 = inlined_call_operand.vmem [shape: bf16[32,32], index: 6, kind: input, shape index: {}]
  %s7 = inlined_call_operand.hbm [shape: f32[1,32], index: 7, kind: input, shape index: {}]
  %s8 = inlined_call_operand.vmem [shape: bf16[32,32], index: 8, kind: input, shape index: {}]
  %s9 = inlined_call_operand.hbm [shape: f32[1,32], index: 9, kind: input, shape index: {}]
  %s10 = inlined_call_operand.vmem [shape: bf16[4,8,32], index: 10, kind: input, shape index: {}]
  %s11 = inlined_call_operand.hbm [shape: f32[1,32], index: 11, kind: input, shape index: {}]
  %s12 = inlined_call_operand.hbm [shape: f32[1,32], index: 12, kind: input, shape index: {}]
  %s13 = inlined_call_operand.hbm [shape: f32[1,32], index: 13, kind: input, shape index: {}]
  %s14 = inlined_call_operand.hbm [shape: f32[1,32], index: 14, kind: input, shape index: {}]
  %s15 = inlined_call_operand.hbm [shape: f32[1,32], index: 15, kind: input, shape index: {}]
  %s16 = inlined_call_operand.hbm [shape: bf16[32,64], index: 16, kind: input, shape index: {}]
  %s17 = inlined_call_operand.hbm [shape: f32[1,64], index: 17, kind: input, shape index: {}]
  %s18 = inlined_call_operand.vmem [shape: bf16[64,32], index: 18, kind: input, shape index: {}]
  %s19 = inlined_call_operand.vmem [shape: f32[1,32], index: 19, kind: input, shape index: {}]
  %s20 = inlined_call_operand.hbm [shape: f32[8,64], index: 20, kind: output, shape index: {}]
  %s21 = sld [smem:[#allocation0]]
  $region146: #{tpu_custom_call.1} parent=0
    _
  %s23 = ssub.s32 1, %s21
  %s24 = scalar_select 0, %s23, %s21
  $region1: #{tpu_custom_call.1} parent=0
    #allocation2 [shape = 'u8[4096]{0}', space=vmem, size = 0x1000, scoped, tag = 'input window, operand 0, single buffered']
    #allocation3 [shape = 's32[1]{0}', space=sflag, size = 0x4, scoped, tag = 'scoped memory for tpu_custom_call.1']
    #allocation4 [shape = 's32[1]{0}', space=sflag, size = 0x4, scoped, tag = 'scoped memory for tpu_custom_call.1']
    #allocation5 [shape = 'u8[4096]{0}', space=vmem, size = 0x1000, scoped, tag = 'input window, operand 1, single buffered']
    #allocation6 [shape = 's32[1]{0}', space=sflag, size = 0x4, scoped, tag = 'scoped memory for tpu_custom_call.1']
    #allocation7 [shape = 'u8[4096]{0}', space=vmem, size = 0x1000, scoped, tag = 'input window, operand 2, single buffered']
    #allocation8 [shape = 'u8[4096]{0}', space=vmem, size = 0x1000, scoped, tag = 'input window, operand 3, single buffered']
    #allocation9 [shape = 's32[1]{0}', space=sflag, size = 0x4, scoped, tag = 'scoped memory for tpu_custom_call.1']
    #allocation10 [shape = 'u8[512]{0}', space=vmem, size = 0x400, scoped, tag = 'input window, operand 5, single buffered']
    #allocation11 [shape = 'u8[512]{0}', space=vmem, size = 0x400, scoped, tag = 'input window, operand 7, single buffered']
    #allocation12 [shape = 's32[1]{0}', space=sflag, size = 0x4, scoped, tag = 'scoped memory for tpu_custom_call.1']
    #allocation13 [shape = 'u8[512]{0}', space=vmem, size = 0x400, scoped, tag = 'input window, operand 9, single buffered']
    #allocation14 [shape = 'u8[512]{0}', space=vmem, size = 0x400, scoped, tag = 'input window, operand 11, single buffered']
    #allocation15 [shape = 's32[1]{0}', space=sflag, size = 0x4, scoped, tag = 'scoped memory for tpu_custom_call.1']
    #allocation16 [shape = 'u8[512]{0}', space=vmem, size = 0x400, scoped, tag = 'input window, operand 12, single buffered']
    #allocation17 [shape = 'u8[512]{0}', space=vmem, size = 0x400, scoped, tag = 'input window, operand 13, single buffered']
    #allocation18 [shape = 's32[1]{0}', space=sflag, size = 0x4, scoped, tag = 'scoped memory for tpu_custom_call.1']
    #allocation19 [shape = 'u8[512]{0}', space=vmem, size = 0x400, scoped, tag = 'input window, operand 14, single buffered']
    #allocation20 [shape = 'u8[512]{0}', space=vmem, size = 0x400, scoped, tag = 'input window, operand 15, single buffered']
    #allocation21 [shape = 's32[1]{0}', space=sflag, size = 0x4, scoped, tag = 'scoped memory for tpu_custom_call.1']
    #allocation22 [shape = 'u8[8192]{0}', space=vmem, size = 0x2000, scoped, tag = 'input window, operand 16, single buffered']
    #allocation23 [shape = 'u8[512]{0}', space=vmem, size = 0x400, scoped, tag = 'input window, operand 17, single buffered']
    #allocation24 [shape = 's32[1]{0}', space=sflag, size = 0x4, scoped, tag = 'scoped memory for tpu_custom_call.1']
    #allocation25 [shape = 'u8[4096]{0}', space=vmem, size = 0x1000, scoped, tag = 'output window, operand 0, single buffered']
    %25 = vsyncpa [#allocation3], 0
    %26 = vsyncpa [#allocation6], 0
    %27 = vsyncpa [#allocation9], 0
    %28 = vsyncpa [#allocation12], 0
    %29 = vsyncpa [#allocation15], 0
    %30 = vsyncpa [#allocation18], 0
    %31 = vsyncpa [#allocation21], 0
    %32 = vsyncpa [#allocation24], 0
    %33 = vsyncpa [#allocation4], 0
    // Predicated region
    $region2: #{tpu_custom_call.1} parent=1 // pred_check
      _
    $region3: #{tpu_custom_call.1} parent=1 // pred_check_branch
      %35 = sbr.rel (0) target = $region5
    $region4: #{tpu_custom_call.1} parent=1 // pred_region
      %s37 = ssub.s32 128, 128
      %38 = vsyncadd [#allocation3], %s37
      %s40 = sshll.u32 [#allocation2], 4
      %s41 = int_to_ptr.vmem [resolvable:$true] %s40
      %43 = dma.hbm_to_vmem [thread:$0]  %s0, 128, %s41, [#allocation3]
    $region5: #{tpu_custom_call.1} parent=1 // pred_fallthru
      _
    // Predicated region
    $region6: #{tpu_custom_call.1} parent=1 // pred_check
      _
    $region7: #{tpu_custom_call.1} parent=1 // pred_check_branch
      %45 = sbr.rel (0) target = $region9
    $region8: #{tpu_custom_call.1} parent=1 // pred_region
      %s47 = ssub.s32 128, 128
      %48 = vsyncadd [#allocation6], %s47
      %s50 = sshll.u32 [#allocation5], 4
      %s51 = int_to_ptr.vmem [resolvable:$true] %s50
      %53 = dma.hbm_to_vmem [thread:$0]  %s1, 128, %s51, [#allocation6]
    $region9: #{tpu_custom_call.1} parent=1 // pred_fallthru
      _
    // Predicated region
    $region10: #{tpu_custom_call.1} parent=1 // pred_check
      _
    $region11: #{tpu_custom_call.1} parent=1 // pred_check_branch
      %55 = sbr.rel (0) target = $region13
    $region12: #{tpu_custom_call.1} parent=1 // pred_region
      %s57 = ssub.s32 128, 128
      %58 = vsyncadd [#allocation6], %s57
      %s60 = sshll.u32 [#allocation7], 4
      %s61 = int_to_ptr.vmem [resolvable:$true] %s60
      %63 = dma.hbm_to_vmem [thread:$0]  %s2, 128, %s61, [#allocation6]
    $region13: #{tpu_custom_call.1} parent=1 // pred_fallthru
      _
    // Predicated region
    $region14: #{tpu_custom_call.1} parent=1 // pred_check
      _
    $region15: #{tpu_custom_call.1} parent=1 // pred_check_branch
      %65 = sbr.rel (0) target = $region17
    $region16: #{tpu_custom_call.1} parent=1 // pred_region
      %s67 = ssub.s32 128, 128
      %68 = vsyncadd [#allocation9], %s67
      %s70 = sshll.u32 [#allocation8], 4
      %s71 = int_to_ptr.vmem [resolvable:$true] %s70
      %73 = dma.hbm_to_vmem [thread:$0]  %s3, 128, %s71, [#allocation9]
    $region17: #{tpu_custom_call.1} parent=1 // pred_fallthru
      _
    // Predicated region
    $region18: #{tpu_custom_call.1} parent=1 // pred_check
      _
    $region19: #{tpu_custom_call.1} parent=1 // pred_check_branch
      %75 = sbr.rel (0) target = $region21
    $region20: #{tpu_custom_call.1} parent=1 // pred_region
      _
    $region21: #{tpu_custom_call.1} parent=1 // pred_fallthru
      _
    // Predicated region
    $region22: #{tpu_custom_call.1} parent=1 // pred_check
      _
    $region23: #{tpu_custom_call.1} parent=1 // pred_check_branch
      %77 = sbr.rel (0) target = $region25
    $region24: #{tpu_custom_call.1} parent=1 // pred_region
      %s79 = ssub.s32 16, 16
      %80 = vsyncadd [#allocation9], %s79
      %s82 = sshll.u32 [#allocation10], 4
      %s83 = int_to_ptr.vmem [resolvable:$true] %s82
      %85 = dma.hbm_to_vmem [thread:$0]  %s5, 16, %s83, [#allocation9]
    $region25: #{tpu_custom_call.1} parent=1 // pred_fallthru
      _
    // Predicated region
    $region26: #{tpu_custom_call.1} parent=1 // pred_check
      _
    $region27: #{tpu_custom_call.1} parent=1 // pred_check_branch
      %87 = sbr.rel (0) target = $region29
    $region28: #{tpu_custom_call.1} parent=1 // pred_region
      _
    $region29: #{tpu_custom_call.1} parent=1 // pred_fallthru
      _
    // Predicated region
    $region30: #{tpu_custom_call.1} parent=1 // pred_check
      _
    $region31: #{tpu_custom_call.1} parent=1 // pred_check_branch
      %89 = sbr.rel (0) target = $region33
    $region32: #{tpu_custom_call.1} parent=1 // pred_region
      %s91 = ssub.s32 16, 16
      %92 = vsyncadd [#allocation12], %s91
      %s94 = sshll.u32 [#allocation11], 4
      %s95 = int_to_ptr.vmem [resolvable:$true] %s94
      %97 = dma.hbm_to_vmem [thread:$0]  %s7, 16, %s95, [#allocation12]
    $region33: #{tpu_custom_call.1} parent=1 // pred_fallthru
      _
    // Predicated region
    $region34: #{tpu_custom_call.1} parent=1 // pred_check
      _
    $region35: #{tpu_custom_call.1} parent=1 // pred_check_branch
      %99 = sbr.rel (0) target = $region37
    $region36: #{tpu_custom_call.1} parent=1 // pred_region
      _
    $region37: #{tpu_custom_call.1} parent=1 // pred_fallthru
      _
    // Predicated region
    $region38: #{tpu_custom_call.1} parent=1 // pred_check
      _
    $region39: #{tpu_custom_call.1} parent=1 // pred_check_branch
      %101 = sbr.rel (0) target = $region41
    $region40: #{tpu_custom_call.1} parent=1 // pred_region
      %s103 = ssub.s32 16, 16
      %104 = vsyncadd [#allocation12], %s103
      %s106 = sshll.u32 [#allocation13], 4
      %s107 = int_to_ptr.vmem [resolvable:$true] %s106
      %109 = dma.hbm_to_vmem [thread:$0]  %s9, 16, %s107, [#allocation12]
    $region41: #{tpu_custom_call.1} parent=1 // pred_fallthru
      _
    // Predicated region
    $region42: #{tpu_custom_call.1} parent=1 // pred_check
      _
    $region43: #{tpu_custom_call.1} parent=1 // pred_check_branch
      %111 = sbr.rel (0) target = $region45
    $region44: #{tpu_custom_call.1} parent=1 // pred_region
      _
    $region45: #{tpu_custom_call.1} parent=1 // pred_fallthru
      _
    // Predicated region
    $region46: #{tpu_custom_call.1} parent=1 // pred_check
      _
    $region47: #{tpu_custom_call.1} parent=1 // pred_check_branch
      %113 = sbr.rel (0) target = $region49
    $region48: #{tpu_custom_call.1} parent=1 // pred_region
      %s115 = ssub.s32 16, 16
      %116 = vsyncadd [#allocation15], %s115
      %s118 = sshll.u32 [#allocation14], 4
      %s119 = int_to_ptr.vmem [resolvable:$true] %s118
      %121 = dma.hbm_to_vmem [thread:$0]  %s11, 16, %s119, [#allocation15]
    $region49: #{tpu_custom_call.1} parent=1 // pred_fallthru
      _
    // Predicated region
    $region50: #{tpu_custom_call.1} parent=1 // pred_check
      _
    $region51: #{tpu_custom_call.1} parent=1 // pred_check_branch
      %123 = sbr.rel (0) target = $region53
    $region52: #{tpu_custom_call.1} parent=1 // pred_region
      %s125 = ssub.s32 16, 16
      %126 = vsyncadd [#allocation15], %s125
      %s128 = sshll.u32 [#allocation16], 4
      %s129 = int_to_ptr.vmem [resolvable:$true] %s128
      %131 = dma.hbm_to_vmem [thread:$0]  %s12, 16, %s129, [#allocation15]
    $region53: #{tpu_custom_call.1} parent=1 // pred_fallthru
      _
    // Predicated region
    $region54: #{tpu_custom_call.1} parent=1 // pred_check
      _
    $region55: #{tpu_custom_call.1} parent=1 // pred_check_branch
      %133 = sbr.rel (0) target = $region57
    $region56: #{tpu_custom_call.1} parent=1 // pred_region
      %s135 = ssub.s32 16, 16
      %136 = vsyncadd [#allocation18], %s135
      %s138 = sshll.u32 [#allocation17], 4
      %s139 = int_to_ptr.vmem [resolvable:$true] %s138
      %141 = dma.hbm_to_vmem [thread:$0]  %s13, 16, %s139, [#allocation18]
    $region57: #{tpu_custom_call.1} parent=1 // pred_fallthru
      _
    // Predicated region
    $region58: #{tpu_custom_call.1} parent=1 // pred_check
      _
    $region59: #{tpu_custom_call.1} parent=1 // pred_check_branch
      %143 = sbr.rel (0) target = $region61
    $region60: #{tpu_custom_call.1} parent=1 // pred_region
      %s145 = ssub.s32 16, 16
      %146 = vsyncadd [#allocation18], %s145
      %s148 = sshll.u32 [#allocation19], 4
      %s149 = int_to_ptr.vmem [resolvable:$true] %s148
      %151 = dma.hbm_to_vmem [thread:$0]  %s14, 16, %s149, [#allocation18]
    $region61: #{tpu_custom_call.1} parent=1 // pred_fallthru
      _
    // Predicated region
    $region62: #{tpu_custom_call.1} parent=1 // pred_check
      _
    $region63: #{tpu_custom_call.1} parent=1 // pred_check_branch
      %153 = sbr.rel (0) target = $region65
    $region64: #{tpu_custom_call.1} parent=1 // pred_region
      %s155 = ssub.s32 16, 16
      %156 = vsyncadd [#allocation21], %s155
      %s158 = sshll.u32 [#allocation20], 4
      %s159 = int_to_ptr.vmem [resolvable:$true] %s158
      %161 = dma.hbm_to_vmem [thread:$0]  %s15, 16, %s159, [#allocation21]
    $region65: #{tpu_custom_call.1} parent=1 // pred_fallthru
      _
    // Predicated region
    $region66: #{tpu_custom_call.1} parent=1 // pred_check
      _
    $region67: #{tpu_custom_call.1} parent=1 // pred_check_branch
      %163 = sbr.rel (0) target = $region69
    $region68: #{tpu_custom_call.1} parent=1 // pred_region
      %s165 = ssub.s32 256, 256
      %166 = vsyncadd [#allocation21], %s165
      %s167 = sshll.u32 [#allocation22], 4
      %s168 = int_to_ptr.vmem [resolvable:$true] %s167
      %173 = dma.hbm_to_vmem [thread:$0]  %s16, 256, %s168, [#allocation21], 64, 64, 4
    $region69: #{tpu_custom_call.1} parent=1 // pred_fallthru
      _
    // Predicated region
    $region70: #{tpu_custom_call.1} parent=1 // pred_check
      _
    $region71: #{tpu_custom_call.1} parent=1 // pred_check_branch
      %175 = sbr.rel (0) target = $region73
    $region72: #{tpu_custom_call.1} parent=1 // pred_region
      %s177 = ssub.s32 16, 16
      %178 = vsyncadd [#allocation24], %s177
      %s180 = sshll.u32 [#allocation23], 4
      %s181 = int_to_ptr.vmem [resolvable:$true] %s180
      %183 = dma.hbm_to_vmem [thread:$0]  %s17, 16, %s181, [#allocation24]
    $region73: #{tpu_custom_call.1} parent=1 // pred_fallthru
      _
    // Predicated region
    $region74: #{tpu_custom_call.1} parent=1 // pred_check
      _
    $region75: #{tpu_custom_call.1} parent=1 // pred_check_branch
      %185 = sbr.rel (0) target = $region77
    $region76: #{tpu_custom_call.1} parent=1 // pred_region
      _
    $region77: #{tpu_custom_call.1} parent=1 // pred_fallthru
      _
    // Predicated region
    $region78: #{tpu_custom_call.1} parent=1 // pred_check
      _
    $region79: #{tpu_custom_call.1} parent=1 // pred_check_branch
      %187 = sbr.rel (0) target = $region81
    $region80: #{tpu_custom_call.1} parent=1 // pred_region
      _
    $region81: #{tpu_custom_call.1} parent=1 // pred_fallthru
      _
    // Predicated region
    $region82: #{tpu_custom_call.1} parent=1 // pred_check
      _
    $region83: #{tpu_custom_call.1} parent=1 // pred_check_branch
      %189 = sbr.rel (0) target = $region85
    $region84: #{tpu_custom_call.1} parent=1 // pred_region
      %190 = dma.done [#allocation3], 128
    $region85: #{tpu_custom_call.1} parent=1 // pred_fallthru
      _
    // Predicated region
    $region86: #{tpu_custom_call.1} parent=1 // pred_check
      _
    $region87: #{tpu_custom_call.1} parent=1 // pred_check_branch
      %192 = sbr.rel (0) target = $region89
    $region88: #{tpu_custom_call.1} parent=1 // pred_region
      %193 = dma.done [#allocation6], 128
    $region89: #{tpu_custom_call.1} parent=1 // pred_fallthru
      _
    // Predicated region
    $region90: #{tpu_custom_call.1} parent=1 // pred_check
      _
    $region91: #{tpu_custom_call.1} parent=1 // pred_check_branch
      %195 = sbr.rel (0) target = $region93
    $region92: #{tpu_custom_call.1} parent=1 // pred_region
      %196 = dma.done [#allocation6], 128
    $region93: #{tpu_custom_call.1} parent=1 // pred_fallthru
      _
    // Predicated region
    $region94: #{tpu_custom_call.1} parent=1 // pred_check
      _
    $region95: #{tpu_custom_call.1} parent=1 // pred_check_branch
      %198 = sbr.rel (0) target = $region97
    $region96: #{tpu_custom_call.1} parent=1 // pred_region
      %199 = dma.done [#allocation9], 128
    $region97: #{tpu_custom_call.1} parent=1 // pred_fallthru
      _
    // Predicated region
    $region98: #{tpu_custom_call.1} parent=1 // pred_check
      _
    $region99: #{tpu_custom_call.1} parent=1 // pred_check_branch
      %201 = sbr.rel (0) target = $region101
    $region100: #{tpu_custom_call.1} parent=1 // pred_region
      %202 = dma.done [#allocation9], 16
    $region101: #{tpu_custom_call.1} parent=1 // pred_fallthru
      _
    // Predicated region
    $region102: #{tpu_custom_call.1} parent=1 // pred_check
      _
    $region103: #{tpu_custom_call.1} parent=1 // pred_check_branch
      %204 = sbr.rel (0) target = $region105
    $region104: #{tpu_custom_call.1} parent=1 // pred_region
      %205 = dma.done [#allocation12], 16
    $region105: #{tpu_custom_call.1} parent=1 // pred_fallthru
      _
    // Predicated region
    $region106: #{tpu_custom_call.1} parent=1 // pred_check
      _
    $region107: #{tpu_custom_call.1} parent=1 // pred_check_branch
      %207 = sbr.rel (0) target = $region109
    $region108: #{tpu_custom_call.1} parent=1 // pred_region
      %208 = dma.done [#allocation12], 16
    $region109: #{tpu_custom_call.1} parent=1 // pred_fallthru
      _
    // Predicated region
    $region110: #{tpu_custom_call.1} parent=1 // pred_check
      _
    $region111: #{tpu_custom_call.1} parent=1 // pred_check_branch
      %210 = sbr.rel (0) target = $region113
    $region112: #{tpu_custom_call.1} parent=1 // pred_region
      %211 = dma.done [#allocation15], 16
    $region113: #{tpu_custom_call.1} parent=1 // pred_fallthru
      _
    // Predicated region
    $region114: #{tpu_custom_call.1} parent=1 // pred_check
      _
    $region115: #{tpu_custom_call.1} parent=1 // pred_check_branch
      %213 = sbr.rel (0) target = $region117
    $region116: #{tpu_custom_call.1} parent=1 // pred_region
      %214 = dma.done [#allocation15], 16
    $region117: #{tpu_custom_call.1} parent=1 // pred_fallthru
      _
    // Predicated region
    $region118: #{tpu_custom_call.1} parent=1 // pred_check
      _
    $region119: #{tpu_custom_call.1} parent=1 // pred_check_branch
      %216 = sbr.rel (0) target = $region121
    $region120: #{tpu_custom_call.1} parent=1 // pred_region
      %217 = dma.done [#allocation18], 16
    $region121: #{tpu_custom_call.1} parent=1 // pred_fallthru
      _
    // Predicated region
    $region122: #{tpu_custom_call.1} parent=1 // pred_check
      _
    $region123: #{tpu_custom_call.1} parent=1 // pred_check_branch
      %219 = sbr.rel (0) target = $region125
    $region124: #{tpu_custom_call.1} parent=1 // pred_region
      %220 = dma.done [#allocation18], 16
    $region125: #{tpu_custom_call.1} parent=1 // pred_fallthru
      _
    // Predicated region
    $region126: #{tpu_custom_call.1} parent=1 // pred_check
      _
    $region127: #{tpu_custom_call.1} parent=1 // pred_check_branch
      %222 = sbr.rel (0) target = $region129
    $region128: #{tpu_custom_call.1} parent=1 // pred_region
      %223 = dma.done [#allocation21], 16
    $region129: #{tpu_custom_call.1} parent=1 // pred_fallthru
      _
    // Predicated region
    $region130: #{tpu_custom_call.1} parent=1 // pred_check
      _
    $region131: #{tpu_custom_call.1} parent=1 // pred_check_branch
      %225 = sbr.rel (0) target = $region133
    $region132: #{tpu_custom_call.1} parent=1 // pred_region
      %226 = dma.done [#allocation21], 256
    $region133: #{tpu_custom_call.1} parent=1 // pred_fallthru
      _
    // Predicated region
    $region134: #{tpu_custom_call.1} parent=1 // pred_check
      _
    $region135: #{tpu_custom_call.1} parent=1 // pred_check_branch
      %228 = sbr.rel (0) target = $region137
    $region136: #{tpu_custom_call.1} parent=1 // pred_region
      %229 = dma.done [#allocation24], 16
    $region137: #{tpu_custom_call.1} parent=1 // pred_fallthru
      _
    %v231 = vld [vmem:[#allocation2] sm:$0xff]
    %233 = vrot.lane.b32.xlu0 %v231, 96
    %v234 = vpop.permute.xlu0 %233
    %v236 = vld [vmem:[#allocation5] sm:$0xff]
    %238 = vrot.lane.b32.xlu0 %v236, 96
    %v239 = vpop.permute.xlu0 %238
    %v241 = vld [vmem:[#allocation7] sm:$0xff]
    %243 = vrot.lane.b32.xlu0 %v241, 96
    %v244 = vpop.permute.xlu0 %243
    %v246 = vpack.c.bf16 %v234, %v231
    %v247 = vld [vmem:[%s4] sm:$0xf]
    %v248 = vld [vmem:[%s4 + $0x4] sm:$0xf]
    %v249 = vld [vmem:[%s4 + $0x8] sm:$0xf]
    %v250 = vld [vmem:[%s4 + $0xc] sm:$0xf]
    %v251 = vld [vmem:[#allocation10] sm:$0x1]
    %v253 = vlaneseq
    %v254 = vshrl.u32 %v253, 7
    %v255 = vsub.s32 0, %v254
    %v256 = vrot.slane %v251, %v255
    %v262 = vunpack.c.l.b16 %v247
    %v263 = vunpack.c.l.b16 %v248
    %v264 = vunpack.c.l.b16 %v249
    %v265 = vunpack.c.l.b16 %v250
    %v266 = vpack.c.b16 %v263, %v262
    %v267 = vpack.c.b16 %v265, %v264
    %vm270 = vcmask 261120
    %v272 = vsel %vm270, %v246, 0
    %274 = vmatprep.subr.bf16.mxu0 0
    %275 = vmatpush1.bf16.msra.mxu0 0
    %276 = vmatprep.subr.bf16.mxu0 0
    %277 = vmatpush1.bf16.msra.mxu0 0
    %278 = vmatprep.subr.bf16.mxu0 0
    %279 = vmatpush1.bf16.msra.mxu0 0
    %280 = vmatprep.subr.bf16.mxu0 0
    %281 = vmatpush1.bf16.msra.mxu0 0
    %282 = vmatprep.subr.bf16.mxu0 0
    %283 = vmatpush1.bf16.msra.mxu0 0
    %284 = vmatprep.subr.bf16.mxu0 0
    %285 = vmatpush1.bf16.msra.mxu0 0
    %286 = vmatprep.subr.bf16.mxu0 0
    %287 = vmatpush1.bf16.msra.mxu0 %v267
    %288 = vmatprep.subr.bf16.mxu0 0
    %289 = vmatpush1.bf16.msra.mxu0 %v266
    %290 = vmatprep.subr.bf16.mxu0 0
    %291 = vmatpush2.bf16.msra.mxu0 0
    %292 = vmatprep.subr.bf16.mxu0 0
    %293 = vmatpush2.bf16.msra.mxu0 0
    %294 = vmatprep.subr.bf16.mxu0 0
    %295 = vmatpush2.bf16.msra.mxu0 0
    %296 = vmatprep.subr.bf16.mxu0 0
    %297 = vmatpush2.bf16.msra.mxu0 0
    %298 = vmatprep.subr.bf16.mxu0 0
    %299 = vmatpush2.bf16.msra.mxu0 0
    %300 = vmatprep.subr.bf16.mxu0 0
    %301 = vmatpush2.bf16.msra.mxu0 0
    %302 = vmatprep.subr.bf16.mxu0 0
    %303 = vmatpush2.bf16.msra.mxu0 0
    %304 = vmatprep.subr.bf16.mxu0 0
    %305 = vmatpush2.bf16.msra.mxu0 0
    %306 = vmatprep.mubr.bf16.mxu0 0
    %307 = vmatmul.mubr.bf16.gmra.mxu0 %v272
    %v308 = vpop.f32.mrf.mxu0
    %v309 = vadd.f32 %v256, %v308
    %v310 = vpop.f32.mrf.mxu0
    %v311 = vpop.f32.mrf.mxu0
    %v312 = vadd.f32 %v256, %v311
    %v313 = vpop.f32.mrf.mxu0
    %314 = vdwg.mxu0
    %v315 = vpack.c.bf16 %v239, %v236
    %v316 = vld [vmem:[%s6] sm:$0xf]
    %v317 = vld [vmem:[%s6 + $0x4] sm:$0xf]
    %v318 = vld [vmem:[%s6 + $0x8] sm:$0xf]
    %v319 = vld [vmem:[%s6 + $0xc] sm:$0xf]
    %v320 = vld [vmem:[#allocation11] sm:$0x1]
    %v322 = vlaneseq
    %v323 = vshrl.u32 %v322, 7
    %v324 = vsub.s32 0, %v323
    %v325 = vrot.slane %v320, %v324
    %v331 = vunpack.c.l.b16 %v316
    %v332 = vunpack.c.l.b16 %v317
    %v333 = vunpack.c.l.b16 %v318
    %v334 = vunpack.c.l.b16 %v319
    %v335 = vpack.c.b16 %v332, %v331
    %v336 = vpack.c.b16 %v334, %v333
    %v340 = vsel %vm270, %v315, 0
    %342 = vmatprep.subr.bf16.mxu0 0
    %343 = vmatpush1.bf16.msra.mxu0 0
    %344 = vmatprep.subr.bf16.mxu0 0
    %345 = vmatpush1.bf16.msra.mxu0 0
    %346 = vmatprep.subr.bf16.mxu0 0
    %347 = vmatpush1.bf16.msra.mxu0 0
    %348 = vmatprep.subr.bf16.mxu0 0
    %349 = vmatpush1.bf16.msra.mxu0 0
    %350 = vmatprep.subr.bf16.mxu0 0
    %351 = vmatpush1.bf16.msra.mxu0 0
    %352 = vmatprep.subr.bf16.mxu0 0
    %353 = vmatpush1.bf16.msra.mxu0 0
    %354 = vmatprep.subr.bf16.mxu0 0
    %355 = vmatpush1.bf16.msra.mxu0 %v336
    %356 = vmatprep.subr.bf16.mxu0 0
    %357 = vmatpush1.bf16.msra.mxu0 %v335
    %358 = vmatprep.subr.bf16.mxu0 0
    %359 = vmatpush2.bf16.msra.mxu0 0
    %360 = vmatprep.subr.bf16.mxu0 0
    %361 = vmatpush2.bf16.msra.mxu0 0
    %362 = vmatprep.subr.bf16.mxu0 0
    %363 = vmatpush2.bf16.msra.mxu0 0
    %364 = vmatprep.subr.bf16.mxu0 0
    %365 = vmatpush2.bf16.msra.mxu0 0
    %366 = vmatprep.subr.bf16.mxu0 0
    %367 = vmatpush2.bf16.msra.mxu0 0
    %368 = vmatprep.subr.bf16.mxu0 0
    %369 = vmatpush2.bf16.msra.mxu0 0
    %370 = vmatprep.subr.bf16.mxu0 0
    %371 = vmatpush2.bf16.msra.mxu0 0
    %372 = vmatprep.subr.bf16.mxu0 0
    %373 = vmatpush2.bf16.msra.mxu0 0
    %374 = vmatprep.mubr.bf16.mxu0 0
    %375 = vmatmul.mubr.bf16.gmra.mxu0 %v340
    %v376 = vpop.f32.mrf.mxu0
    %v377 = vadd.f32 %v325, %v376
    %v378 = vpop.f32.mrf.mxu0
    %v379 = vpop.f32.mrf.mxu0
    %v380 = vadd.f32 %v325, %v379
    %v381 = vpop.f32.mrf.mxu0
    %382 = vdwg.mxu0
    %v383 = vpack.c.bf16 %v244, %v241
    %v384 = vld [vmem:[%s8] sm:$0xf]
    %v385 = vld [vmem:[%s8 + $0x4] sm:$0xf]
    %v386 = vld [vmem:[%s8 + $0x8] sm:$0xf]
    %v387 = vld [vmem:[%s8 + $0xc] sm:$0xf]
    %v388 = vld [vmem:[#allocation13] sm:$0x1]
    %v390 = vlaneseq
    %v391 = vshrl.u32 %v390, 7
    %v392 = vsub.s32 0, %v391
    %v393 = vrot.slane %v388, %v392
    %v399 = vunpack.c.l.b16 %v384
    %v400 = vunpack.c.l.b16 %v385
    %v401 = vunpack.c.l.b16 %v386
    %v402 = vunpack.c.l.b16 %v387
    %v403 = vpack.c.b16 %v400, %v399
    %v404 = vpack.c.b16 %v402, %v401
    %v408 = vsel %vm270, %v383, 0
    %410 = vmatprep.subr.bf16.mxu0 0
    %411 = vmatpush1.bf16.msra.mxu0 0
    %412 = vmatprep.subr.bf16.mxu0 0
    %413 = vmatpush1.bf16.msra.mxu0 0
    %414 = vmatprep.subr.bf16.mxu0 0
    %415 = vmatpush1.bf16.msra.mxu0 0
    %416 = vmatprep.subr.bf16.mxu0 0
    %417 = vmatpush1.bf16.msra.mxu0 0
    %418 = vmatprep.subr.bf16.mxu0 0
    %419 = vmatpush1.bf16.msra.mxu0 0
    %420 = vmatprep.subr.bf16.mxu0 0
    %421 = vmatpush1.bf16.msra.mxu0 0
    %422 = vmatprep.subr.bf16.mxu0 0
    %423 = vmatpush1.bf16.msra.mxu0 %v404
    %424 = vmatprep.subr.bf16.mxu0 0
    %425 = vmatpush1.bf16.msra.mxu0 %v403
    %426 = vmatprep.subr.bf16.mxu0 0
    %427 = vmatpush2.bf16.msra.mxu0 0
    %428 = vmatprep.subr.bf16.mxu0 0
    %429 = vmatpush2.bf16.msra.mxu0 0
    %430 = vmatprep.subr.bf16.mxu0 0
    %431 = vmatpush2.bf16.msra.mxu0 0
    %432 = vmatprep.subr.bf16.mxu0 0
    %433 = vmatpush2.bf16.msra.mxu0 0
    %434 = vmatprep.subr.bf16.mxu0 0
    %435 = vmatpush2.bf16.msra.mxu0 0
    %436 = vmatprep.subr.bf16.mxu0 0
    %437 = vmatpush2.bf16.msra.mxu0 0
    %438 = vmatprep.subr.bf16.mxu0 0
    %439 = vmatpush2.bf16.msra.mxu0 0
    %440 = vmatprep.subr.bf16.mxu0 0
    %441 = vmatpush2.bf16.msra.mxu0 0
    %442 = vmatprep.mubr.bf16.mxu0 0
    %443 = vmatmul.mubr.bf16.gmra.mxu0 %v408
    %v444 = vpop.f32.mrf.mxu0
    %v445 = vadd.f32 %v393, %v444
    %v446 = vpop.f32.mrf.mxu0
    %v447 = vpop.f32.mrf.mxu0
    %v448 = vadd.f32 %v393, %v447
    %v449 = vpop.f32.mrf.mxu0
    %450 = vdwg.mxu0
    %452 = vrot.lane.b32.xlu0 %v309, 120
    %v453 = vpop.permute.xlu0 %452
    %455 = vrot.lane.b32.xlu0 %v309, 112
    %v456 = vpop.permute.xlu0 %455
    %458 = vrot.lane.b32.xlu0 %v309, 104
    %v459 = vpop.permute.xlu0 %458
    %462 = vrot.lane.b32.xlu0 %v312, 120
    %v463 = vpop.permute.xlu0 %462
    %465 = vrot.lane.b32.xlu0 %v312, 112
    %v466 = vpop.permute.xlu0 %465
    %468 = vrot.lane.b32.xlu0 %v312, 104
    %v469 = vpop.permute.xlu0 %468
    %v471 = vpack.c.bf16 %v309, %v309
    %v472 = vpack.c.bf16 %v453, %v453
    %v473 = vpack.c.bf16 %v456, %v456
    %v474 = vpack.c.bf16 %v459, %v459
    %v475 = vpack.c.bf16 %v312, %v312
    %v476 = vpack.c.bf16 %v463, %v463
    %v477 = vpack.c.bf16 %v466, %v466
    %v478 = vpack.c.bf16 %v469, %v469
    %480 = vrot.lane.b32.xlu0 %v377, 120
    %v481 = vpop.permute.xlu0 %480
    %483 = vrot.lane.b32.xlu0 %v377, 112
    %v484 = vpop.permute.xlu0 %483
    %486 = vrot.lane.b32.xlu0 %v377, 104
    %v487 = vpop.permute.xlu0 %486
    %490 = vrot.lane.b32.xlu0 %v380, 120
    %v491 = vpop.permute.xlu0 %490
    %493 = vrot.lane.b32.xlu0 %v380, 112
    %v494 = vpop.permute.xlu0 %493
    %496 = vrot.lane.b32.xlu0 %v380, 104
    %v497 = vpop.permute.xlu0 %496
    %v499 = vpack.c.bf16 %v377, %v377
    %v500 = vpack.c.bf16 %v481, %v481
    %v501 = vpack.c.bf16 %v484, %v484
    %v502 = vpack.c.bf16 %v487, %v487
    %v503 = vpack.c.bf16 %v380, %v380
    %v504 = vpack.c.bf16 %v491, %v491
    %v505 = vpack.c.bf16 %v494, %v494
    %v506 = vpack.c.bf16 %v497, %v497
    %508 = vrot.lane.b32.xlu0 %v445, 120
    %v509 = vpop.permute.xlu0 %508
    %511 = vrot.lane.b32.xlu0 %v445, 112
    %v512 = vpop.permute.xlu0 %511
    %514 = vrot.lane.b32.xlu0 %v445, 104
    %v515 = vpop.permute.xlu0 %514
    %518 = vrot.lane.b32.xlu0 %v448, 120
    %v519 = vpop.permute.xlu0 %518
    %521 = vrot.lane.b32.xlu0 %v448, 112
    %v522 = vpop.permute.xlu0 %521
    %524 = vrot.lane.b32.xlu0 %v448, 104
    %v525 = vpop.permute.xlu0 %524
    %v527 = vpack.c.bf16 %v445, %v445
    %v528 = vpack.c.bf16 %v509, %v509
    %v529 = vpack.c.bf16 %v512, %v512
    %v530 = vpack.c.bf16 %v515, %v515
    %v531 = vpack.c.bf16 %v448, %v448
    %v532 = vpack.c.bf16 %v519, %v519
    %v533 = vpack.c.bf16 %v522, %v522
    %v534 = vpack.c.bf16 %v525, %v525
    %v535 = vld [vmem:[#allocation8] sm:$0xff]
    %vm536 = vcmask 64512
    %v538 = vsel %vm536, %v471, 0
    %v541 = vsel %vm536, %v499, 0
    %543 = vmatprep.subr.bf16.mxu0 0
    %544 = vmatpush1.bf16.xpose.msra.mxu0 0
    %545 = vmatprep.subr.bf16.mxu0 0
    %546 = vmatpush1.bf16.xpose.msra.mxu0 0
    %547 = vmatprep.subr.bf16.mxu0 0
    %548 = vmatpush1.bf16.xpose.msra.mxu0 0
    %549 = vmatprep.subr.bf16.mxu0 0
    %550 = vmatpush1.bf16.xpose.msra.mxu0 0
    %551 = vmatprep.subr.bf16.mxu0 0
    %552 = vmatpush1.bf16.xpose.msra.mxu0 0
    %553 = vmatprep.subr.bf16.mxu0 0
    %554 = vmatpush1.bf16.xpose.msra.mxu0 0
    %555 = vmatprep.subr.bf16.mxu0 0
    %556 = vmatpush1.bf16.xpose.msra.mxu0 0
    %557 = vmatprep.subr.bf16.mxu0 0
    %558 = vmatpush1.bf16.xpose.msra.mxu0 %v541
    %559 = vmatprep.subr.bf16.mxu0 0
    %560 = vmatpush2.bf16.xpose.msra.mxu0 0
    %561 = vmatprep.subr.bf16.mxu0 0
    %562 = vmatpush2.bf16.xpose.msra.mxu0 0
    %563 = vmatprep.subr.bf16.mxu0 0
    %564 = vmatpush2.bf16.xpose.msra.mxu0 0
    %565 = vmatprep.subr.bf16.mxu0 0
    %566 = vmatpush2.bf16.xpose.msra.mxu0 0
    %567 = vmatprep.subr.bf16.mxu0 0
    %568 = vmatpush2.bf16.xpose.msra.mxu0 0
    %569 = vmatprep.subr.bf16.mxu0 0
    %570 = vmatpush2.bf16.xpose.msra.mxu0 0
    %571 = vmatprep.subr.bf16.mxu0 0
    %572 = vmatpush2.bf16.xpose.msra.mxu0 0
    %573 = vmatprep.subr.bf16.mxu0 0
    %574 = vmatpush2.bf16.xpose.msra.mxu0 0
    %575 = vmatprep.mubr.bf16.mxu0 0
    %576 = vmatmul.mubr.bf16.gmra.mxu0 %v538
    %v577 = vpop.f32.mrf.mxu0
    %v578 = vadd.f32 %v535, %v577
    %v579 = vpop.f32.mrf.mxu0
    %v580 = vpop.f32.mrf.mxu0
    %v581 = vpop.f32.mrf.mxu0
    %582 = vdwg.mxu0
    %v584 = vsel %vm536, %v472, 0
    %v587 = vsel %vm536, %v500, 0
    %589 = vmatprep.subr.bf16.mxu0 0
    %590 = vmatpush1.bf16.xpose.msra.mxu0 0
    %591 = vmatprep.subr.bf16.mxu0 0
    %592 = vmatpush1.bf16.xpose.msra.mxu0 0
    %593 = vmatprep.subr.bf16.mxu0 0
    %594 = vmatpush1.bf16.xpose.msra.mxu0 0
    %595 = vmatprep.subr.bf16.mxu0 0
    %596 = vmatpush1.bf16.xpose.msra.mxu0 0
    %597 = vmatprep.subr.bf16.mxu0 0
    %598 = vmatpush1.bf16.xpose.msra.mxu0 0
    %599 = vmatprep.subr.bf16.mxu0 0
    %600 = vmatpush1.bf16.xpose.msra.mxu0 0
    %601 = vmatprep.subr.bf16.mxu0 0
    %602 = vmatpush1.bf16.xpose.msra.mxu0 0
    %603 = vmatprep.subr.bf16.mxu0 0
    %604 = vmatpush1.bf16.xpose.msra.mxu0 %v587
    %605 = vmatprep.subr.bf16.mxu0 0
    %606 = vmatpush2.bf16.xpose.msra.mxu0 0
    %607 = vmatprep.subr.bf16.mxu0 0
    %608 = vmatpush2.bf16.xpose.msra.mxu0 0
    %609 = vmatprep.subr.bf16.mxu0 0
    %610 = vmatpush2.bf16.xpose.msra.mxu0 0
    %611 = vmatprep.subr.bf16.mxu0 0
    %612 = vmatpush2.bf16.xpose.msra.mxu0 0
    %613 = vmatprep.subr.bf16.mxu0 0
    %614 = vmatpush2.bf16.xpose.msra.mxu0 0
    %615 = vmatprep.subr.bf16.mxu0 0
    %616 = vmatpush2.bf16.xpose.msra.mxu0 0
    %617 = vmatprep.subr.bf16.mxu0 0
    %618 = vmatpush2.bf16.xpose.msra.mxu0 0
    %619 = vmatprep.subr.bf16.mxu0 0
    %620 = vmatpush2.bf16.xpose.msra.mxu0 0
    %621 = vmatprep.mubr.bf16.mxu0 0
    %622 = vmatmul.mubr.bf16.gmra.mxu0 %v584
    %v623 = vpop.f32.mrf.mxu0
    %v624 = vadd.f32 %v535, %v623
    %v625 = vpop.f32.mrf.mxu0
    %v626 = vpop.f32.mrf.mxu0
    %v627 = vpop.f32.mrf.mxu0
    %628 = vdwg.mxu0
    %v630 = vsel %vm536, %v473, 0
    %v633 = vsel %vm536, %v501, 0
    %635 = vmatprep.subr.bf16.mxu0 0
    %636 = vmatpush1.bf16.xpose.msra.mxu0 0
    %637 = vmatprep.subr.bf16.mxu0 0
    %638 = vmatpush1.bf16.xpose.msra.mxu0 0
    %639 = vmatprep.subr.bf16.mxu0 0
    %640 = vmatpush1.bf16.xpose.msra.mxu0 0
    %641 = vmatprep.subr.bf16.mxu0 0
    %642 = vmatpush1.bf16.xpose.msra.mxu0 0
    %643 = vmatprep.subr.bf16.mxu0 0
    %644 = vmatpush1.bf16.xpose.msra.mxu0 0
    %645 = vmatprep.subr.bf16.mxu0 0
    %646 = vmatpush1.bf16.xpose.msra.mxu0 0
    %647 = vmatprep.subr.bf16.mxu0 0
    %648 = vmatpush1.bf16.xpose.msra.mxu0 0
    %649 = vmatprep.subr.bf16.mxu0 0
    %650 = vmatpush1.bf16.xpose.msra.mxu0 %v633
    %651 = vmatprep.subr.bf16.mxu0 0
    %652 = vmatpush2.bf16.xpose.msra.mxu0 0
    %653 = vmatprep.subr.bf16.mxu0 0
    %654 = vmatpush2.bf16.xpose.msra.mxu0 0
    %655 = vmatprep.subr.bf16.mxu0 0
    %656 = vmatpush2.bf16.xpose.msra.mxu0 0
    %657 = vmatprep.subr.bf16.mxu0 0
    %658 = vmatpush2.bf16.xpose.msra.mxu0 0
    %659 = vmatprep.subr.bf16.mxu0 0
    %660 = vmatpush2.bf16.xpose.msra.mxu0 0
    %661 = vmatprep.subr.bf16.mxu0 0
    %662 = vmatpush2.bf16.xpose.msra.mxu0 0
    %663 = vmatprep.subr.bf16.mxu0 0
    %664 = vmatpush2.bf16.xpose.msra.mxu0 0
    %665 = vmatprep.subr.bf16.mxu0 0
    %666 = vmatpush2.bf16.xpose.msra.mxu0 0
    %667 = vmatprep.mubr.bf16.mxu0 0
    %668 = vmatmul.mubr.bf16.gmra.mxu0 %v630
    %v669 = vpop.f32.mrf.mxu0
    %v670 = vadd.f32 %v535, %v669
    %v671 = vpop.f32.mrf.mxu0
    %v672 = vpop.f32.mrf.mxu0
    %v673 = vpop.f32.mrf.mxu0
    %674 = vdwg.mxu0
    %v676 = vsel %vm536, %v474, 0
    %v679 = vsel %vm536, %v502, 0
    %681 = vmatprep.subr.bf16.mxu0 0
    %682 = vmatpush1.bf16.xpose.msra.mxu0 0
    %683 = vmatprep.subr.bf16.mxu0 0
    %684 = vmatpush1.bf16.xpose.msra.mxu0 0
    %685 = vmatprep.subr.bf16.mxu0 0
    %686 = vmatpush1.bf16.xpose.msra.mxu0 0
    %687 = vmatprep.subr.bf16.mxu0 0
    %688 = vmatpush1.bf16.xpose.msra.mxu0 0
    %689 = vmatprep.subr.bf16.mxu0 0
    %690 = vmatpush1.bf16.xpose.msra.mxu0 0
    %691 = vmatprep.subr.bf16.mxu0 0
    %692 = vmatpush1.bf16.xpose.msra.mxu0 0
    %693 = vmatprep.subr.bf16.mxu0 0
    %694 = vmatpush1.bf16.xpose.msra.mxu0 0
    %695 = vmatprep.subr.bf16.mxu0 0
    %696 = vmatpush1.bf16.xpose.msra.mxu0 %v679
    %697 = vmatprep.subr.bf16.mxu0 0
    %698 = vmatpush2.bf16.xpose.msra.mxu0 0
    %699 = vmatprep.subr.bf16.mxu0 0
    %700 = vmatpush2.bf16.xpose.msra.mxu0 0
    %701 = vmatprep.subr.bf16.mxu0 0
    %702 = vmatpush2.bf16.xpose.msra.mxu0 0
    %703 = vmatprep.subr.bf16.mxu0 0
    %704 = vmatpush2.bf16.xpose.msra.mxu0 0
    %705 = vmatprep.subr.bf16.mxu0 0
    %706 = vmatpush2.bf16.xpose.msra.mxu0 0
    %707 = vmatprep.subr.bf16.mxu0 0
    %708 = vmatpush2.bf16.xpose.msra.mxu0 0
    %709 = vmatprep.subr.bf16.mxu0 0
    %710 = vmatpush2.bf16.xpose.msra.mxu0 0
    %711 = vmatprep.subr.bf16.mxu0 0
    %712 = vmatpush2.bf16.xpose.msra.mxu0 0
    %713 = vmatprep.mubr.bf16.mxu0 0
    %714 = vmatmul.mubr.bf16.gmra.mxu0 %v676
    %v715 = vpop.f32.mrf.mxu0
    %v716 = vadd.f32 %v535, %v715
    %v717 = vpop.f32.mrf.mxu0
    %v718 = vpop.f32.mrf.mxu0
    %v719 = vpop.f32.mrf.mxu0
    %720 = vdwg.mxu0
    %v722 = vsel %vm536, %v475, 0
    %v725 = vsel %vm536, %v503, 0
    %727 = vmatprep.subr.bf16.mxu0 0
    %728 = vmatpush1.bf16.xpose.msra.mxu0 0
    %729 = vmatprep.subr.bf16.mxu0 0
    %730 = vmatpush1.bf16.xpose.msra.mxu0 0
    %731 = vmatprep.subr.bf16.mxu0 0
    %732 = vmatpush1.bf16.xpose.msra.mxu0 0
    %733 = vmatprep.subr.bf16.mxu0 0
    %734 = vmatpush1.bf16.xpose.msra.mxu0 0
    %735 = vmatprep.subr.bf16.mxu0 0
    %736 = vmatpush1.bf16.xpose.msra.mxu0 0
    %737 = vmatprep.subr.bf16.mxu0 0
    %738 = vmatpush1.bf16.xpose.msra.mxu0 0
    %739 = vmatprep.subr.bf16.mxu0 0
    %740 = vmatpush1.bf16.xpose.msra.mxu0 0
    %741 = vmatprep.subr.bf16.mxu0 0
    %742 = vmatpush1.bf16.xpose.msra.mxu0 %v725
    %743 = vmatprep.subr.bf16.mxu0 0
    %744 = vmatpush2.bf16.xpose.msra.mxu0 0
    %745 = vmatprep.subr.bf16.mxu0 0
    %746 = vmatpush2.bf16.xpose.msra.mxu0 0
    %747 = vmatprep.subr.bf16.mxu0 0
    %748 = vmatpush2.bf16.xpose.msra.mxu0 0
    %749 = vmatprep.subr.bf16.mxu0 0
    %750 = vmatpush2.bf16.xpose.msra.mxu0 0
    %751 = vmatprep.subr.bf16.mxu0 0
    %752 = vmatpush2.bf16.xpose.msra.mxu0 0
    %753 = vmatprep.subr.bf16.mxu0 0
    %754 = vmatpush2.bf16.xpose.msra.mxu0 0
    %755 = vmatprep.subr.bf16.mxu0 0
    %756 = vmatpush2.bf16.xpose.msra.mxu0 0
    %757 = vmatprep.subr.bf16.mxu0 0
    %758 = vmatpush2.bf16.xpose.msra.mxu0 0
    %759 = vmatprep.mubr.bf16.mxu0 0
    %760 = vmatmul.mubr.bf16.gmra.mxu0 %v722
    %v761 = vpop.f32.mrf.mxu0
    %v762 = vadd.f32 %v535, %v761
    %v763 = vpop.f32.mrf.mxu0
    %v764 = vpop.f32.mrf.mxu0
    %v765 = vpop.f32.mrf.mxu0
    %766 = vdwg.mxu0
    %v768 = vsel %vm536, %v476, 0
    %v771 = vsel %vm536, %v504, 0
    %773 = vmatprep.subr.bf16.mxu0 0
    %774 = vmatpush1.bf16.xpose.msra.mxu0 0
    %775 = vmatprep.subr.bf16.mxu0 0
    %776 = vmatpush1.bf16.xpose.msra.mxu0 0
    %777 = vmatprep.subr.bf16.mxu0 0
    %778 = vmatpush1.bf16.xpose.msra.mxu0 0
    %779 = vmatprep.subr.bf16.mxu0 0
    %780 = vmatpush1.bf16.xpose.msra.mxu0 0
    %781 = vmatprep.subr.bf16.mxu0 0
    %782 = vmatpush1.bf16.xpose.msra.mxu0 0
    %783 = vmatprep.subr.bf16.mxu0 0
    %784 = vmatpush1.bf16.xpose.msra.mxu0 0
    %785 = vmatprep.subr.bf16.mxu0 0
    %786 = vmatpush1.bf16.xpose.msra.mxu0 0
    %787 = vmatprep.subr.bf16.mxu0 0
    %788 = vmatpush1.bf16.xpose.msra.mxu0 %v771
    %789 = vmatprep.subr.bf16.mxu0 0
    %790 = vmatpush2.bf16.xpose.msra.mxu0 0
    %791 = vmatprep.subr.bf16.mxu0 0
    %792 = vmatpush2.bf16.xpose.msra.mxu0 0
    %793 = vmatprep.subr.bf16.mxu0 0
    %794 = vmatpush2.bf16.xpose.msra.mxu0 0
    %795 = vmatprep.subr.bf16.mxu0 0
    %796 = vmatpush2.bf16.xpose.msra.mxu0 0
    %797 = vmatprep.subr.bf16.mxu0 0
    %798 = vmatpush2.bf16.xpose.msra.mxu0 0
    %799 = vmatprep.subr.bf16.mxu0 0
    %800 = vmatpush2.bf16.xpose.msra.mxu0 0
    %801 = vmatprep.subr.bf16.mxu0 0
    %802 = vmatpush2.bf16.xpose.msra.mxu0 0
    %803 = vmatprep.subr.bf16.mxu0 0
    %804 = vmatpush2.bf16.xpose.msra.mxu0 0
    %805 = vmatprep.mubr.bf16.mxu0 0
    %806 = vmatmul.mubr.bf16.gmra.mxu0 %v768
    %v807 = vpop.f32.mrf.mxu0
    %v808 = vadd.f32 %v535, %v807
    %v809 = vpop.f32.mrf.mxu0
    %v810 = vpop.f32.mrf.mxu0
    %v811 = vpop.f32.mrf.mxu0
    %812 = vdwg.mxu0
    %v814 = vsel %vm536, %v477, 0
    %v817 = vsel %vm536, %v505, 0
    %819 = vmatprep.subr.bf16.mxu0 0
    %820 = vmatpush1.bf16.xpose.msra.mxu0 0
    %821 = vmatprep.subr.bf16.mxu0 0
    %822 = vmatpush1.bf16.xpose.msra.mxu0 0
    %823 = vmatprep.subr.bf16.mxu0 0
    %824 = vmatpush1.bf16.xpose.msra.mxu0 0
    %825 = vmatprep.subr.bf16.mxu0 0
    %826 = vmatpush1.bf16.xpose.msra.mxu0 0
    %827 = vmatprep.subr.bf16.mxu0 0
    %828 = vmatpush1.bf16.xpose.msra.mxu0 0
    %829 = vmatprep.subr.bf16.mxu0 0
    %830 = vmatpush1.bf16.xpose.msra.mxu0 0
    %831 = vmatprep.subr.bf16.mxu0 0
    %832 = vmatpush1.bf16.xpose.msra.mxu0 0
    %833 = vmatprep.subr.bf16.mxu0 0
    %834 = vmatpush1.bf16.xpose.msra.mxu0 %v817
    %835 = vmatprep.subr.bf16.mxu0 0
    %836 = vmatpush2.bf16.xpose.msra.mxu0 0
    %837 = vmatprep.subr.bf16.mxu0 0
    %838 = vmatpush2.bf16.xpose.msra.mxu0 0
    %839 = vmatprep.subr.bf16.mxu0 0
    %840 = vmatpush2.bf16.xpose.msra.mxu0 0
    %841 = vmatprep.subr.bf16.mxu0 0
    %842 = vmatpush2.bf16.xpose.msra.mxu0 0
    %843 = vmatprep.subr.bf16.mxu0 0
    %844 = vmatpush2.bf16.xpose.msra.mxu0 0
    %845 = vmatprep.subr.bf16.mxu0 0
    %846 = vmatpush2.bf16.xpose.msra.mxu0 0
    %847 = vmatprep.subr.bf16.mxu0 0
    %848 = vmatpush2.bf16.xpose.msra.mxu0 0
    %849 = vmatprep.subr.bf16.mxu0 0
    %850 = vmatpush2.bf16.xpose.msra.mxu0 0
    %851 = vmatprep.mubr.bf16.mxu0 0
    %852 = vmatmul.mubr.bf16.gmra.mxu0 %v814
    %v853 = vpop.f32.mrf.mxu0
    %v854 = vadd.f32 %v535, %v853
    %v855 = vpop.f32.mrf.mxu0
    %v856 = vpop.f32.mrf.mxu0
    %v857 = vpop.f32.mrf.mxu0
    %858 = vdwg.mxu0
    %v860 = vsel %vm536, %v478, 0
    %v863 = vsel %vm536, %v506, 0
    %865 = vmatprep.subr.bf16.mxu0 0
    %866 = vmatpush1.bf16.xpose.msra.mxu0 0
    %867 = vmatprep.subr.bf16.mxu0 0
    %868 = vmatpush1.bf16.xpose.msra.mxu0 0
    %869 = vmatprep.subr.bf16.mxu0 0
    %870 = vmatpush1.bf16.xpose.msra.mxu0 0
    %871 = vmatprep.subr.bf16.mxu0 0
    %872 = vmatpush1.bf16.xpose.msra.mxu0 0
    %873 = vmatprep.subr.bf16.mxu0 0
    %874 = vmatpush1.bf16.xpose.msra.mxu0 0
    %875 = vmatprep.subr.bf16.mxu0 0
    %876 = vmatpush1.bf16.xpose.msra.mxu0 0
    %877 = vmatprep.subr.bf16.mxu0 0
    %878 = vmatpush1.bf16.xpose.msra.mxu0 0
    %879 = vmatprep.subr.bf16.mxu0 0
    %880 = vmatpush1.bf16.xpose.msra.mxu0 %v863
    %881 = vmatprep.subr.bf16.mxu0 0
    %882 = vmatpush2.bf16.xpose.msra.mxu0 0
    %883 = vmatprep.subr.bf16.mxu0 0
    %884 = vmatpush2.bf16.xpose.msra.mxu0 0
    %885 = vmatprep.subr.bf16.mxu0 0
    %886 = vmatpush2.bf16.xpose.msra.mxu0 0
    %887 = vmatprep.subr.bf16.mxu0 0
    %888 = vmatpush2.bf16.xpose.msra.mxu0 0
    %889 = vmatprep.subr.bf16.mxu0 0
    %890 = vmatpush2.bf16.xpose.msra.mxu0 0
    %891 = vmatprep.subr.bf16.mxu0 0
    %892 = vmatpush2.bf16.xpose.msra.mxu0 0
    %893 = vmatprep.subr.bf16.mxu0 0
    %894 = vmatpush2.bf16.xpose.msra.mxu0 0
    %895 = vmatprep.subr.bf16.mxu0 0
    %896 = vmatpush2.bf16.xpose.msra.mxu0 0
    %897 = vmatprep.mubr.bf16.mxu0 0
    %898 = vmatmul.mubr.bf16.gmra.mxu0 %v860
    %v899 = vpop.f32.mrf.mxu0
    %v900 = vadd.f32 %v535, %v899
    %v901 = vpop.f32.mrf.mxu0
    %v902 = vpop.f32.mrf.mxu0
    %v903 = vpop.f32.mrf.mxu0
    %904 = vdwg.mxu0
    %v905 = vsel %vm536, %v578, -inf
    %906 = vmax.xlane.f32.xlu0 %v905
    %v907 = vpop.xlane.xlu0 %906
    %v908 = vsel %vm536, %v624, -inf
    %909 = vmax.xlane.f32.xlu0 %v908
    %v910 = vpop.xlane.xlu0 %909
    %v911 = vsel %vm536, %v670, -inf
    %912 = vmax.xlane.f32.xlu0 %v911
    %v913 = vpop.xlane.xlu0 %912
    %v914 = vsel %vm536, %v716, -inf
    %915 = vmax.xlane.f32.xlu0 %v914
    %v916 = vpop.xlane.xlu0 %915
    %v917 = vsel %vm536, %v762, -inf
    %918 = vmax.xlane.f32.xlu0 %v917
    %v919 = vpop.xlane.xlu0 %918
    %v920 = vsel %vm536, %v808, -inf
    %921 = vmax.xlane.f32.xlu0 %v920
    %v922 = vpop.xlane.xlu0 %921
    %v923 = vsel %vm536, %v854, -inf
    %924 = vmax.xlane.f32.xlu0 %v923
    %v925 = vpop.xlane.xlu0 %924
    %v926 = vsel %vm536, %v900, -inf
    %927 = vmax.xlane.f32.xlu0 %v926
    %v928 = vpop.xlane.xlu0 %927
    %v929 = vsub.f32 %v578, %v907
    %v930 = vsub.f32 %v624, %v910
    %v931 = vsub.f32 %v670, %v913
    %v932 = vsub.f32 %v716, %v916
    %v933 = vsub.f32 %v762, %v919
    %v934 = vsub.f32 %v808, %v922
    %v935 = vsub.f32 %v854, %v925
    %v936 = vsub.f32 %v900, %v928
    %v937 = vmul.f32 %v929, 1.442695
    %v938 = vpow.pop %v937
    %v939 = vmul.f32 %v930, 1.442695
    %v940 = vpow.pop %v939
    %v941 = vmul.f32 %v931, 1.442695
    %v942 = vpow.pop %v941
    %v943 = vmul.f32 %v932, 1.442695
    %v944 = vpow.pop %v943
    %v945 = vmul.f32 %v933, 1.442695
    %v946 = vpow.pop %v945
    %v947 = vmul.f32 %v934, 1.442695
    %v948 = vpow.pop %v947
    %v949 = vmul.f32 %v935, 1.442695
    %v950 = vpow.pop %v949
    %v951 = vmul.f32 %v936, 1.442695
    %v952 = vpow.pop %v951
    %v953 = vsel %vm536, %v938, 0.0
    %954 = vadd.xlane.f32.xlu0 %v953
    %v955 = vpop.xlane.xlu0 %954
    %v956 = vsel %vm536, %v940, 0.0
    %957 = vadd.xlane.f32.xlu0 %v956
    %v958 = vpop.xlane.xlu0 %957
    %v959 = vsel %vm536, %v942, 0.0
    %960 = vadd.xlane.f32.xlu0 %v959
    %v961 = vpop.xlane.xlu0 %960
    %v962 = vsel %vm536, %v944, 0.0
    %963 = vadd.xlane.f32.xlu0 %v962
    %v964 = vpop.xlane.xlu0 %963
    %v965 = vsel %vm536, %v946, 0.0
    %966 = vadd.xlane.f32.xlu0 %v965
    %v967 = vpop.xlane.xlu0 %966
    %v968 = vsel %vm536, %v948, 0.0
    %969 = vadd.xlane.f32.xlu0 %v968
    %v970 = vpop.xlane.xlu0 %969
    %v971 = vsel %vm536, %v950, 0.0
    %972 = vadd.xlane.f32.xlu0 %v971
    %v973 = vpop.xlane.xlu0 %972
    %v974 = vsel %vm536, %v952, 0.0
    %975 = vadd.xlane.f32.xlu0 %v974
    %v976 = vpop.xlane.xlu0 %975
    %v977 = vrcp.pop %v955
    %v978 = vrcp.pop %v958
    %v979 = vrcp.pop %v961
    %v980 = vrcp.pop %v964
    %v981 = vrcp.pop %v967
    %v982 = vrcp.pop %v970
    %v983 = vrcp.pop %v973
    %v984 = vrcp.pop %v976
    %v985 = vmul.f32 %v938, %v977
    %v986 = vmul.f32 %v940, %v978
    %v987 = vmul.f32 %v942, %v979
    %v988 = vmul.f32 %v944, %v980
    %v989 = vmul.f32 %v946, %v981
    %v990 = vmul.f32 %v948, %v982
    %v991 = vmul.f32 %v950, %v983
    %v992 = vmul.f32 %v952, %v984
    %v993 = vpack.c.bf16 %v985, %v985
    %v994 = vpack.c.bf16 %v986, %v986
    %v995 = vpack.c.bf16 %v987, %v987
    %v996 = vpack.c.bf16 %v988, %v988
    %v997 = vpack.c.bf16 %v989, %v989
    %v998 = vpack.c.bf16 %v990, %v990
    %v999 = vpack.c.bf16 %v991, %v991
    %v1000 = vpack.c.bf16 %v992, %v992
    %v1002 = vsel %vm536, %v993, 0
    %vm1004 = vcmask 1043456
    %v1006 = vsel %vm1004, %v527, 0
    %1008 = vmatprep.subr.bf16.mxu0 0
    %1009 = vmatpush1.bf16.msra.mxu0 0
    %1010 = vmatprep.subr.bf16.mxu0 0
    %1011 = vmatpush1.bf16.msra.mxu0 0
    %1012 = vmatprep.subr.bf16.mxu0 0
    %1013 = vmatpush1.bf16.msra.mxu0 0
    %1014 = vmatprep.subr.bf16.mxu0 0
    %1015 = vmatpush1.bf16.msra.mxu0 0
    %1016 = vmatprep.subr.bf16.mxu0 0
    %1017 = vmatpush1.bf16.msra.mxu0 0
    %1018 = vmatprep.subr.bf16.mxu0 0
    %1019 = vmatpush1.bf16.msra.mxu0 0
    %1020 = vmatprep.subr.bf16.mxu0 0
    %1021 = vmatpush1.bf16.msra.mxu0 0
    %1022 = vmatprep.subr.bf16.mxu0 0
    %1023 = vmatpush1.bf16.msra.mxu0 %v1006
    %1024 = vmatprep.subr.bf16.mxu0 0
    %1025 = vmatpush2.bf16.msra.mxu0 0
    %1026 = vmatprep.subr.bf16.mxu0 0
    %1027 = vmatpush2.bf16.msra.mxu0 0
    %1028 = vmatprep.subr.bf16.mxu0 0
    %1029 = vmatpush2.bf16.msra.mxu0 0
    %1030 = vmatprep.subr.bf16.mxu0 0
    %1031 = vmatpush2.bf16.msra.mxu0 0
    %1032 = vmatprep.subr.bf16.mxu0 0
    %1033 = vmatpush2.bf16.msra.mxu0 0
    %1034 = vmatprep.subr.bf16.mxu0 0
    %1035 = vmatpush2.bf16.msra.mxu0 0
    %1036 = vmatprep.subr.bf16.mxu0 0
    %1037 = vmatpush2.bf16.msra.mxu0 0
    %1038 = vmatprep.subr.bf16.mxu0 0
    %1039 = vmatpush2.bf16.msra.mxu0 0
    %1040 = vmatprep.mubr.bf16.mxu0 0
    %1041 = vmatmul.mubr.bf16.gmra.mxu0 %v1002
    %v1042 = vpop.f32.mrf.mxu0
    %v1043 = vadd.f32 0.0, %v1042
    %v1044 = vpop.f32.mrf.mxu0
    %v1045 = vpop.f32.mrf.mxu0
    %v1046 = vpop.f32.mrf.mxu0
    %1047 = vdwg.mxu0
    %v1049 = vsel %vm536, %v994, 0
    %v1052 = vsel %vm1004, %v528, 0
    %1054 = vmatprep.subr.bf16.mxu0 0
    %1055 = vmatpush1.bf16.msra.mxu0 0
    %1056 = vmatprep.subr.bf16.mxu0 0
    %1057 = vmatpush1.bf16.msra.mxu0 0
    %1058 = vmatprep.subr.bf16.mxu0 0
    %1059 = vmatpush1.bf16.msra.mxu0 0
    %1060 = vmatprep.subr.bf16.mxu0 0
    %1061 = vmatpush1.bf16.msra.mxu0 0
    %1062 = vmatprep.subr.bf16.mxu0 0
    %1063 = vmatpush1.bf16.msra.mxu0 0
    %1064 = vmatprep.subr.bf16.mxu0 0
    %1065 = vmatpush1.bf16.msra.mxu0 0
    %1066 = vmatprep.subr.bf16.mxu0 0
    %1067 = vmatpush1.bf16.msra.mxu0 0
    %1068 = vmatprep.subr.bf16.mxu0 0
    %1069 = vmatpush1.bf16.msra.mxu0 %v1052
    %1070 = vmatprep.subr.bf16.mxu0 0
    %1071 = vmatpush2.bf16.msra.mxu0 0
    %1072 = vmatprep.subr.bf16.mxu0 0
    %1073 = vmatpush2.bf16.msra.mxu0 0
    %1074 = vmatprep.subr.bf16.mxu0 0
    %1075 = vmatpush2.bf16.msra.mxu0 0
    %1076 = vmatprep.subr.bf16.mxu0 0
    %1077 = vmatpush2.bf16.msra.mxu0 0
    %1078 = vmatprep.subr.bf16.mxu0 0
    %1079 = vmatpush2.bf16.msra.mxu0 0
    %1080 = vmatprep.subr.bf16.mxu0 0
    %1081 = vmatpush2.bf16.msra.mxu0 0
    %1082 = vmatprep.subr.bf16.mxu0 0
    %1083 = vmatpush2.bf16.msra.mxu0 0
    %1084 = vmatprep.subr.bf16.mxu0 0
    %1085 = vmatpush2.bf16.msra.mxu0 0
    %1086 = vmatprep.mubr.bf16.mxu0 0
    %1087 = vmatmul.mubr.bf16.gmra.mxu0 %v1049
    %v1088 = vpop.f32.mrf.mxu0
    %v1089 = vadd.f32 0.0, %v1088
    %v1090 = vpop.f32.mrf.mxu0
    %v1091 = vpop.f32.mrf.mxu0
    %v1092 = vpop.f32.mrf.mxu0
    %1093 = vdwg.mxu0
    %v1095 = vsel %vm536, %v995, 0
    %v1098 = vsel %vm1004, %v529, 0
    %1100 = vmatprep.subr.bf16.mxu0 0
    %1101 = vmatpush1.bf16.msra.mxu0 0
    %1102 = vmatprep.subr.bf16.mxu0 0
    %1103 = vmatpush1.bf16.msra.mxu0 0
    %1104 = vmatprep.subr.bf16.mxu0 0
    %1105 = vmatpush1.bf16.msra.mxu0 0
    %1106 = vmatprep.subr.bf16.mxu0 0
    %1107 = vmatpush1.bf16.msra.mxu0 0
    %1108 = vmatprep.subr.bf16.mxu0 0
    %1109 = vmatpush1.bf16.msra.mxu0 0
    %1110 = vmatprep.subr.bf16.mxu0 0
    %1111 = vmatpush1.bf16.msra.mxu0 0
    %1112 = vmatprep.subr.bf16.mxu0 0
    %1113 = vmatpush1.bf16.msra.mxu0 0
    %1114 = vmatprep.subr.bf16.mxu0 0
    %1115 = vmatpush1.bf16.msra.mxu0 %v1098
    %1116 = vmatprep.subr.bf16.mxu0 0
    %1117 = vmatpush2.bf16.msra.mxu0 0
    %1118 = vmatprep.subr.bf16.mxu0 0
    %1119 = vmatpush2.bf16.msra.mxu0 0
    %1120 = vmatprep.subr.bf16.mxu0 0
    %1121 = vmatpush2.bf16.msra.mxu0 0
    %1122 = vmatprep.subr.bf16.mxu0 0
    %1123 = vmatpush2.bf16.msra.mxu0 0
    %1124 = vmatprep.subr.bf16.mxu0 0
    %1125 = vmatpush2.bf16.msra.mxu0 0
    %1126 = vmatprep.subr.bf16.mxu0 0
    %1127 = vmatpush2.bf16.msra.mxu0 0
    %1128 = vmatprep.subr.bf16.mxu0 0
    %1129 = vmatpush2.bf16.msra.mxu0 0
    %1130 = vmatprep.subr.bf16.mxu0 0
    %1131 = vmatpush2.bf16.msra.mxu0 0
    %1132 = vmatprep.mubr.bf16.mxu0 0
    %1133 = vmatmul.mubr.bf16.gmra.mxu0 %v1095
    %v1134 = vpop.f32.mrf.mxu0
    %v1135 = vadd.f32 0.0, %v1134
    %v1136 = vpop.f32.mrf.mxu0
    %v1137 = vpop.f32.mrf.mxu0
    %v1138 = vpop.f32.mrf.mxu0
    %1139 = vdwg.mxu0
    %v1141 = vsel %vm536, %v996, 0
    %v1144 = vsel %vm1004, %v530, 0
    %1146 = vmatprep.subr.bf16.mxu0 0
    %1147 = vmatpush1.bf16.msra.mxu0 0
    %1148 = vmatprep.subr.bf16.mxu0 0
    %1149 = vmatpush1.bf16.msra.mxu0 0
    %1150 = vmatprep.subr.bf16.mxu0 0
    %1151 = vmatpush1.bf16.msra.mxu0 0
    %1152 = vmatprep.subr.bf16.mxu0 0
    %1153 = vmatpush1.bf16.msra.mxu0 0
    %1154 = vmatprep.subr.bf16.mxu0 0
    %1155 = vmatpush1.bf16.msra.mxu0 0
    %1156 = vmatprep.subr.bf16.mxu0 0
    %1157 = vmatpush1.bf16.msra.mxu0 0
    %1158 = vmatprep.subr.bf16.mxu0 0
    %1159 = vmatpush1.bf16.msra.mxu0 0
    %1160 = vmatprep.subr.bf16.mxu0 0
    %1161 = vmatpush1.bf16.msra.mxu0 %v1144
    %1162 = vmatprep.subr.bf16.mxu0 0
    %1163 = vmatpush2.bf16.msra.mxu0 0
    %1164 = vmatprep.subr.bf16.mxu0 0
    %1165 = vmatpush2.bf16.msra.mxu0 0
    %1166 = vmatprep.subr.bf16.mxu0 0
    %1167 = vmatpush2.bf16.msra.mxu0 0
    %1168 = vmatprep.subr.bf16.mxu0 0
    %1169 = vmatpush2.bf16.msra.mxu0 0
    %1170 = vmatprep.subr.bf16.mxu0 0
    %1171 = vmatpush2.bf16.msra.mxu0 0
    %1172 = vmatprep.subr.bf16.mxu0 0
    %1173 = vmatpush2.bf16.msra.mxu0 0
    %1174 = vmatprep.subr.bf16.mxu0 0
    %1175 = vmatpush2.bf16.msra.mxu0 0
    %1176 = vmatprep.subr.bf16.mxu0 0
    %1177 = vmatpush2.bf16.msra.mxu0 0
    %1178 = vmatprep.mubr.bf16.mxu0 0
    %1179 = vmatmul.mubr.bf16.gmra.mxu0 %v1141
    %v1180 = vpop.f32.mrf.mxu0
    %v1181 = vadd.f32 0.0, %v1180
    %v1182 = vpop.f32.mrf.mxu0
    %v1183 = vpop.f32.mrf.mxu0
    %v1184 = vpop.f32.mrf.mxu0
    %1185 = vdwg.mxu0
    %v1187 = vsel %vm536, %v997, 0
    %v1190 = vsel %vm1004, %v531, 0
    %1192 = vmatprep.subr.bf16.mxu0 0
    %1193 = vmatpush1.bf16.msra.mxu0 0
    %1194 = vmatprep.subr.bf16.mxu0 0
    %1195 = vmatpush1.bf16.msra.mxu0 0
    %1196 = vmatprep.subr.bf16.mxu0 0
    %1197 = vmatpush1.bf16.msra.mxu0 0
    %1198 = vmatprep.subr.bf16.mxu0 0
    %1199 = vmatpush1.bf16.msra.mxu0 0
    %1200 = vmatprep.subr.bf16.mxu0 0
    %1201 = vmatpush1.bf16.msra.mxu0 0
    %1202 = vmatprep.subr.bf16.mxu0 0
    %1203 = vmatpush1.bf16.msra.mxu0 0
    %1204 = vmatprep.subr.bf16.mxu0 0
    %1205 = vmatpush1.bf16.msra.mxu0 0
    %1206 = vmatprep.subr.bf16.mxu0 0
    %1207 = vmatpush1.bf16.msra.mxu0 %v1190
    %1208 = vmatprep.subr.bf16.mxu0 0
    %1209 = vmatpush2.bf16.msra.mxu0 0
    %1210 = vmatprep.subr.bf16.mxu0 0
    %1211 = vmatpush2.bf16.msra.mxu0 0
    %1212 = vmatprep.subr.bf16.mxu0 0
    %1213 = vmatpush2.bf16.msra.mxu0 0
    %1214 = vmatprep.subr.bf16.mxu0 0
    %1215 = vmatpush2.bf16.msra.mxu0 0
    %1216 = vmatprep.subr.bf16.mxu0 0
    %1217 = vmatpush2.bf16.msra.mxu0 0
    %1218 = vmatprep.subr.bf16.mxu0 0
    %1219 = vmatpush2.bf16.msra.mxu0 0
    %1220 = vmatprep.subr.bf16.mxu0 0
    %1221 = vmatpush2.bf16.msra.mxu0 0
    %1222 = vmatprep.subr.bf16.mxu0 0
    %1223 = vmatpush2.bf16.msra.mxu0 0
    %1224 = vmatprep.mubr.bf16.mxu0 0
    %1225 = vmatmul.mubr.bf16.gmra.mxu0 %v1187
    %v1226 = vpop.f32.mrf.mxu0
    %v1227 = vadd.f32 0.0, %v1226
    %v1228 = vpop.f32.mrf.mxu0
    %v1229 = vpop.f32.mrf.mxu0
    %v1230 = vpop.f32.mrf.mxu0
    %1231 = vdwg.mxu0
    %v1233 = vsel %vm536, %v998, 0
    %v1236 = vsel %vm1004, %v532, 0
    %1238 = vmatprep.subr.bf16.mxu0 0
    %1239 = vmatpush1.bf16.msra.mxu0 0
    %1240 = vmatprep.subr.bf16.mxu0 0
    %1241 = vmatpush1.bf16.msra.mxu0 0
    %1242 = vmatprep.subr.bf16.mxu0 0
    %1243 = vmatpush1.bf16.msra.mxu0 0
    %1244 = vmatprep.subr.bf16.mxu0 0
    %1245 = vmatpush1.bf16.msra.mxu0 0
    %1246 = vmatprep.subr.bf16.mxu0 0
    %1247 = vmatpush1.bf16.msra.mxu0 0
    %1248 = vmatprep.subr.bf16.mxu0 0
    %1249 = vmatpush1.bf16.msra.mxu0 0
    %1250 = vmatprep.subr.bf16.mxu0 0
    %1251 = vmatpush1.bf16.msra.mxu0 0
    %1252 = vmatprep.subr.bf16.mxu0 0
    %1253 = vmatpush1.bf16.msra.mxu0 %v1236
    %1254 = vmatprep.subr.bf16.mxu0 0
    %1255 = vmatpush2.bf16.msra.mxu0 0
    %1256 = vmatprep.subr.bf16.mxu0 0
    %1257 = vmatpush2.bf16.msra.mxu0 0
    %1258 = vmatprep.subr.bf16.mxu0 0
    %1259 = vmatpush2.bf16.msra.mxu0 0
    %1260 = vmatprep.subr.bf16.mxu0 0
    %1261 = vmatpush2.bf16.msra.mxu0 0
    %1262 = vmatprep.subr.bf16.mxu0 0
    %1263 = vmatpush2.bf16.msra.mxu0 0
    %1264 = vmatprep.subr.bf16.mxu0 0
    %1265 = vmatpush2.bf16.msra.mxu0 0
    %1266 = vmatprep.subr.bf16.mxu0 0
    %1267 = vmatpush2.bf16.msra.mxu0 0
    %1268 = vmatprep.subr.bf16.mxu0 0
    %1269 = vmatpush2.bf16.msra.mxu0 0
    %1270 = vmatprep.mubr.bf16.mxu0 0
    %1271 = vmatmul.mubr.bf16.gmra.mxu0 %v1233
    %v1272 = vpop.f32.mrf.mxu0
    %v1273 = vadd.f32 0.0, %v1272
    %v1274 = vpop.f32.mrf.mxu0
    %v1275 = vpop.f32.mrf.mxu0
    %v1276 = vpop.f32.mrf.mxu0
    %1277 = vdwg.mxu0
    %v1279 = vsel %vm536, %v999, 0
    %v1282 = vsel %vm1004, %v533, 0
    %1284 = vmatprep.subr.bf16.mxu0 0
    %1285 = vmatpush1.bf16.msra.mxu0 0
    %1286 = vmatprep.subr.bf16.mxu0 0
    %1287 = vmatpush1.bf16.msra.mxu0 0
    %1288 = vmatprep.subr.bf16.mxu0 0
    %1289 = vmatpush1.bf16.msra.mxu0 0
    %1290 = vmatprep.subr.bf16.mxu0 0
    %1291 = vmatpush1.bf16.msra.mxu0 0
    %1292 = vmatprep.subr.bf16.mxu0 0
    %1293 = vmatpush1.bf16.msra.mxu0 0
    %1294 = vmatprep.subr.bf16.mxu0 0
    %1295 = vmatpush1.bf16.msra.mxu0 0
    %1296 = vmatprep.subr.bf16.mxu0 0
    %1297 = vmatpush1.bf16.msra.mxu0 0
    %1298 = vmatprep.subr.bf16.mxu0 0
    %1299 = vmatpush1.bf16.msra.mxu0 %v1282
    %1300 = vmatprep.subr.bf16.mxu0 0
    %1301 = vmatpush2.bf16.msra.mxu0 0
    %1302 = vmatprep.subr.bf16.mxu0 0
    %1303 = vmatpush2.bf16.msra.mxu0 0
    %1304 = vmatprep.subr.bf16.mxu0 0
    %1305 = vmatpush2.bf16.msra.mxu0 0
    %1306 = vmatprep.subr.bf16.mxu0 0
    %1307 = vmatpush2.bf16.msra.mxu0 0
    %1308 = vmatprep.subr.bf16.mxu0 0
    %1309 = vmatpush2.bf16.msra.mxu0 0
    %1310 = vmatprep.subr.bf16.mxu0 0
    %1311 = vmatpush2.bf16.msra.mxu0 0
    %1312 = vmatprep.subr.bf16.mxu0 0
    %1313 = vmatpush2.bf16.msra.mxu0 0
    %1314 = vmatprep.subr.bf16.mxu0 0
    %1315 = vmatpush2.bf16.msra.mxu0 0
    %1316 = vmatprep.mubr.bf16.mxu0 0
    %1317 = vmatmul.mubr.bf16.gmra.mxu0 %v1279
    %v1318 = vpop.f32.mrf.mxu0
    %v1319 = vadd.f32 0.0, %v1318
    %v1320 = vpop.f32.mrf.mxu0
    %v1321 = vpop.f32.mrf.mxu0
    %v1322 = vpop.f32.mrf.mxu0
    %1323 = vdwg.mxu0
    %v1325 = vsel %vm536, %v1000, 0
    %v1328 = vsel %vm1004, %v534, 0
    %1330 = vmatprep.subr.bf16.mxu0 0
    %1331 = vmatpush1.bf16.msra.mxu0 0
    %1332 = vmatprep.subr.bf16.mxu0 0
    %1333 = vmatpush1.bf16.msra.mxu0 0
    %1334 = vmatprep.subr.bf16.mxu0 0
    %1335 = vmatpush1.bf16.msra.mxu0 0
    %1336 = vmatprep.subr.bf16.mxu0 0
    %1337 = vmatpush1.bf16.msra.mxu0 0
    %1338 = vmatprep.subr.bf16.mxu0 0
    %1339 = vmatpush1.bf16.msra.mxu0 0
    %1340 = vmatprep.subr.bf16.mxu0 0
    %1341 = vmatpush1.bf16.msra.mxu0 0
    %1342 = vmatprep.subr.bf16.mxu0 0
    %1343 = vmatpush1.bf16.msra.mxu0 0
    %1344 = vmatprep.subr.bf16.mxu0 0
    %1345 = vmatpush1.bf16.msra.mxu0 %v1328
    %1346 = vmatprep.subr.bf16.mxu0 0
    %1347 = vmatpush2.bf16.msra.mxu0 0
    %1348 = vmatprep.subr.bf16.mxu0 0
    %1349 = vmatpush2.bf16.msra.mxu0 0
    %1350 = vmatprep.subr.bf16.mxu0 0
    %1351 = vmatpush2.bf16.msra.mxu0 0
    %1352 = vmatprep.subr.bf16.mxu0 0
    %1353 = vmatpush2.bf16.msra.mxu0 0
    %1354 = vmatprep.subr.bf16.mxu0 0
    %1355 = vmatpush2.bf16.msra.mxu0 0
    %1356 = vmatprep.subr.bf16.mxu0 0
    %1357 = vmatpush2.bf16.msra.mxu0 0
    %1358 = vmatprep.subr.bf16.mxu0 0
    %1359 = vmatpush2.bf16.msra.mxu0 0
    %1360 = vmatprep.subr.bf16.mxu0 0
    %1361 = vmatpush2.bf16.msra.mxu0 0
    %1362 = vmatprep.mubr.bf16.mxu0 0
    %1363 = vmatmul.mubr.bf16.gmra.mxu0 %v1325
    %v1364 = vpop.f32.mrf.mxu0
    %v1365 = vadd.f32 0.0, %v1364
    %v1366 = vpop.f32.mrf.mxu0
    %v1367 = vpop.f32.mrf.mxu0
    %v1368 = vpop.f32.mrf.mxu0
    %1369 = vdwg.mxu0
    %v1370 = vpack.c.bf16 %v1227, %v1043
    %v1371 = vld [vmem:[%s10] sm:$0xf]
    %v1372 = vpack.c.bf16 %v1273, %v1089
    %s1373 = scalar_lea.vmem %s10, 4
    %v1374 = vld [vmem:[%s1373] sm:$0xf]
    %v1376 = vsel %vm536, %v1372, 0
    %v1379 = vsel %vm1004, %v1374, 0
    %1381 = vmatprep.subr.bf16.mxu0 0
    %1382 = vmatpush1.bf16.msra.mxu0 0
    %1383 = vmatprep.subr.bf16.mxu0 0
    %1384 = vmatpush1.bf16.msra.mxu0 0
    %1385 = vmatprep.subr.bf16.mxu0 0
    %1386 = vmatpush1.bf16.msra.mxu0 0
    %1387 = vmatprep.subr.bf16.mxu0 0
    %1388 = vmatpush1.bf16.msra.mxu0 0
    %1389 = vmatprep.subr.bf16.mxu0 0
    %1390 = vmatpush1.bf16.msra.mxu0 0
    %1391 = vmatprep.subr.bf16.mxu0 0
    %1392 = vmatpush1.bf16.msra.mxu0 0
    %1393 = vmatprep.subr.bf16.mxu0 0
    %1394 = vmatpush1.bf16.msra.mxu0 0
    %1395 = vmatprep.subr.bf16.mxu0 0
    %1396 = vmatpush1.bf16.msra.mxu0 %v1379
    %1397 = vmatprep.subr.bf16.mxu0 0
    %1398 = vmatpush2.bf16.msra.mxu0 0
    %1399 = vmatprep.subr.bf16.mxu0 0
    %1400 = vmatpush2.bf16.msra.mxu0 0
    %1401 = vmatprep.subr.bf16.mxu0 0
    %1402 = vmatpush2.bf16.msra.mxu0 0
    %1403 = vmatprep.subr.bf16.mxu0 0
    %1404 = vmatpush2.bf16.msra.mxu0 0
    %1405 = vmatprep.subr.bf16.mxu0 0
    %1406 = vmatpush2.bf16.msra.mxu0 0
    %1407 = vmatprep.subr.bf16.mxu0 0
    %1408 = vmatpush2.bf16.msra.mxu0 0
    %1409 = vmatprep.subr.bf16.mxu0 0
    %1410 = vmatpush2.bf16.msra.mxu0 0
    %1411 = vmatprep.subr.bf16.mxu0 0
    %1412 = vmatpush2.bf16.msra.mxu0 0
    %1413 = vmatprep.mubr.bf16.mxu0 0
    %1414 = vmatmul.mubr.bf16.gmra.mxu0 %v1376
    %v1415 = vpop.f32.mrf.mxu0
    %v1416 = vadd.f32 0.0, %v1415
    %v1417 = vpop.f32.mrf.mxu0
    %v1418 = vpop.f32.mrf.mxu0
    %v1419 = vadd.f32 0.0, %v1418
    %v1420 = vpop.f32.mrf.mxu0
    %1421 = vdwg.mxu0
    %v1423 = vsel %vm536, %v1370, 0
    %v1426 = vsel %vm1004, %v1371, 0
    %1428 = vmatprep.subr.bf16.mxu0 0
    %1429 = vmatpush1.bf16.msra.mxu0 0
    %1430 = vmatprep.subr.bf16.mxu0 0
    %1431 = vmatpush1.bf16.msra.mxu0 0
    %1432 = vmatprep.subr.bf16.mxu0 0
    %1433 = vmatpush1.bf16.msra.mxu0 0
    %1434 = vmatprep.subr.bf16.mxu0 0
    %1435 = vmatpush1.bf16.msra.mxu0 0
    %1436 = vmatprep.subr.bf16.mxu0 0
    %1437 = vmatpush1.bf16.msra.mxu0 0
    %1438 = vmatprep.subr.bf16.mxu0 0
    %1439 = vmatpush1.bf16.msra.mxu0 0
    %1440 = vmatprep.subr.bf16.mxu0 0
    %1441 = vmatpush1.bf16.msra.mxu0 0
    %1442 = vmatprep.subr.bf16.mxu0 0
    %1443 = vmatpush1.bf16.msra.mxu0 %v1426
    %1444 = vmatprep.subr.bf16.mxu0 0
    %1445 = vmatpush2.bf16.msra.mxu0 0
    %1446 = vmatprep.subr.bf16.mxu0 0
    %1447 = vmatpush2.bf16.msra.mxu0 0
    %1448 = vmatprep.subr.bf16.mxu0 0
    %1449 = vmatpush2.bf16.msra.mxu0 0
    %1450 = vmatprep.subr.bf16.mxu0 0
    %1451 = vmatpush2.bf16.msra.mxu0 0
    %1452 = vmatprep.subr.bf16.mxu0 0
    %1453 = vmatpush2.bf16.msra.mxu0 0
    %1454 = vmatprep.subr.bf16.mxu0 0
    %1455 = vmatpush2.bf16.msra.mxu0 0
    %1456 = vmatprep.subr.bf16.mxu0 0
    %1457 = vmatpush2.bf16.msra.mxu0 0
    %1458 = vmatprep.subr.bf16.mxu0 0
    %1459 = vmatpush2.bf16.msra.mxu0 0
    %1460 = vmatprep.mubr.bf16.mxu0 0
    %1461 = vmatmul.mubr.bf16.gmra.mxu0 %v1423
    %v1462 = vpop.f32.mrf.mxu0
    %v1463 = vadd.f32 %v1416, %v1462
    %v1464 = vpop.f32.mrf.mxu0
    %v1465 = vpop.f32.mrf.mxu0
    %v1466 = vadd.f32 %v1419, %v1465
    %v1467 = vpop.f32.mrf.mxu0
    %1468 = vdwg.mxu0
    %v1469 = vpack.c.bf16 %v1319, %v1135
    %s1470 = scalar_lea.vmem %s10, 8
    %v1471 = vld [vmem:[%s1470] sm:$0xf]
    %v1473 = vsel %vm536, %v1469, 0
    %v1476 = vsel %vm1004, %v1471, 0
    %1478 = vmatprep.subr.bf16.mxu0 0
    %1479 = vmatpush1.bf16.msra.mxu0 0
    %1480 = vmatprep.subr.bf16.mxu0 0
    %1481 = vmatpush1.bf16.msra.mxu0 0
    %1482 = vmatprep.subr.bf16.mxu0 0
    %1483 = vmatpush1.bf16.msra.mxu0 0
    %1484 = vmatprep.subr.bf16.mxu0 0
    %1485 = vmatpush1.bf16.msra.mxu0 0
    %1486 = vmatprep.subr.bf16.mxu0 0
    %1487 = vmatpush1.bf16.msra.mxu0 0
    %1488 = vmatprep.subr.bf16.mxu0 0
    %1489 = vmatpush1.bf16.msra.mxu0 0
    %1490 = vmatprep.subr.bf16.mxu0 0
    %1491 = vmatpush1.bf16.msra.mxu0 0
    %1492 = vmatprep.subr.bf16.mxu0 0
    %1493 = vmatpush1.bf16.msra.mxu0 %v1476
    %1494 = vmatprep.subr.bf16.mxu0 0
    %1495 = vmatpush2.bf16.msra.mxu0 0
    %1496 = vmatprep.subr.bf16.mxu0 0
    %1497 = vmatpush2.bf16.msra.mxu0 0
    %1498 = vmatprep.subr.bf16.mxu0 0
    %1499 = vmatpush2.bf16.msra.mxu0 0
    %1500 = vmatprep.subr.bf16.mxu0 0
    %1501 = vmatpush2.bf16.msra.mxu0 0
    %1502 = vmatprep.subr.bf16.mxu0 0
    %1503 = vmatpush2.bf16.msra.mxu0 0
    %1504 = vmatprep.subr.bf16.mxu0 0
    %1505 = vmatpush2.bf16.msra.mxu0 0
    %1506 = vmatprep.subr.bf16.mxu0 0
    %1507 = vmatpush2.bf16.msra.mxu0 0
    %1508 = vmatprep.subr.bf16.mxu0 0
    %1509 = vmatpush2.bf16.msra.mxu0 0
    %1510 = vmatprep.mubr.bf16.mxu0 0
    %1511 = vmatmul.mubr.bf16.gmra.mxu0 %v1473
    %v1512 = vpop.f32.mrf.mxu0
    %v1513 = vadd.f32 0.0, %v1512
    %v1514 = vpop.f32.mrf.mxu0
    %v1515 = vpop.f32.mrf.mxu0
    %v1516 = vadd.f32 0.0, %v1515
    %v1517 = vpop.f32.mrf.mxu0
    %1518 = vdwg.mxu0
    %v1519 = vadd.f32 %v1463, %v1513
    %v1520 = vadd.f32 %v1466, %v1516
    %v1521 = vpack.c.bf16 %v1365, %v1181
    %s1522 = scalar_lea.vmem %s10, 12
    %v1523 = vld [vmem:[%s1522] sm:$0xf]
    %v1525 = vsel %vm536, %v1521, 0
    %v1528 = vsel %vm1004, %v1523, 0
    %1530 = vmatprep.subr.bf16.mxu0 0
    %1531 = vmatpush1.bf16.msra.mxu0 0
    %1532 = vmatprep.subr.bf16.mxu0 0
    %1533 = vmatpush1.bf16.msra.mxu0 0
    %1534 = vmatprep.subr.bf16.mxu0 0
    %1535 = vmatpush1.bf16.msra.mxu0 0
    %1536 = vmatprep.subr.bf16.mxu0 0
    %1537 = vmatpush1.bf16.msra.mxu0 0
    %1538 = vmatprep.subr.bf16.mxu0 0
    %1539 = vmatpush1.bf16.msra.mxu0 0
    %1540 = vmatprep.subr.bf16.mxu0 0
    %1541 = vmatpush1.bf16.msra.mxu0 0
    %1542 = vmatprep.subr.bf16.mxu0 0
    %1543 = vmatpush1.bf16.msra.mxu0 0
    %1544 = vmatprep.subr.bf16.mxu0 0
    %1545 = vmatpush1.bf16.msra.mxu0 %v1528
    %1546 = vmatprep.subr.bf16.mxu0 0
    %1547 = vmatpush2.bf16.msra.mxu0 0
    %1548 = vmatprep.subr.bf16.mxu0 0
    %1549 = vmatpush2.bf16.msra.mxu0 0
    %1550 = vmatprep.subr.bf16.mxu0 0
    %1551 = vmatpush2.bf16.msra.mxu0 0
    %1552 = vmatprep.subr.bf16.mxu0 0
    %1553 = vmatpush2.bf16.msra.mxu0 0
    %1554 = vmatprep.subr.bf16.mxu0 0
    %1555 = vmatpush2.bf16.msra.mxu0 0
    %1556 = vmatprep.subr.bf16.mxu0 0
    %1557 = vmatpush2.bf16.msra.mxu0 0
    %1558 = vmatprep.subr.bf16.mxu0 0
    %1559 = vmatpush2.bf16.msra.mxu0 0
    %1560 = vmatprep.subr.bf16.mxu0 0
    %1561 = vmatpush2.bf16.msra.mxu0 0
    %1562 = vmatprep.mubr.bf16.mxu0 0
    %1563 = vmatmul.mubr.bf16.gmra.mxu0 %v1525
    %v1564 = vpop.f32.mrf.mxu0
    %v1565 = vadd.f32 0.0, %v1564
    %v1566 = vpop.f32.mrf.mxu0
    %v1567 = vpop.f32.mrf.mxu0
    %v1568 = vadd.f32 0.0, %v1567
    %v1569 = vpop.f32.mrf.mxu0
    %1570 = vdwg.mxu0
    %v1571 = vadd.f32 %v1519, %v1565
    %v1572 = vadd.f32 %v1520, %v1568
    %v1573 = vld [vmem:[#allocation14] sm:$0x1]
    %v1575 = vlaneseq
    %v1576 = vshrl.u32 %v1575, 7
    %v1577 = vsub.s32 0, %v1576
    %v1578 = vrot.slane %v1573, %v1577
    %v1580 = vadd.f32 %v1571, %v1578
    %v1581 = vadd.f32 %v1572, %v1578
    %v1582 = vadd.f32 %v1580, %v241
    %v1583 = vadd.f32 %v1581, %v244
    %v1584 = vsel %vm270, %v1582, 0.0
    %1585 = vadd.xlane.f32.xlu0 %v1584
    %v1586 = vpop.xlane.xlu0 %1585
    %v1587 = vsel %vm270, %v1583, 0.0
    %1588 = vadd.xlane.f32.xlu0 %v1587
    %v1589 = vpop.xlane.xlu0 %1588
    %v1590 = vrcp.pop 32.0
    %v1591 = vmul.f32 %v1586, %v1590
    %v1592 = vmul.f32 %v1589, %v1590
    %v1593 = vsub.f32 %v1582, %v1591
    %v1594 = vsub.f32 %v1583, %v1592
    %v1595 = vmul.f32 %v1593, %v1593
    %v1596 = vmul.f32 %v1594, %v1594
    %v1597 = vsel %vm270, %v1595, 0.0
    %1598 = vadd.xlane.f32.xlu0 %v1597
    %v1599 = vpop.xlane.xlu0 %1598
    %v1600 = vsel %vm270, %v1596, 0.0
    %1601 = vadd.xlane.f32.xlu0 %v1600
    %v1602 = vpop.xlane.xlu0 %1601
    %v1603 = vmul.f32 %v1599, %v1590
    %v1604 = vmul.f32 %v1602, %v1590
    %v1605 = vadd.f32 %v1603, 1e-05
    %v1606 = vadd.f32 %v1604, 1e-05
    %v1607 = vrsqrt.pop %v1605
    %v1608 = vrsqrt.pop %v1606
    %v1609 = vmul.f32 %v1593, %v1607
    %v1610 = vmul.f32 %v1594, %v1608
    %v1611 = vld [vmem:[#allocation16] sm:$0x1]
    %v1613 = vlaneseq
    %v1614 = vshrl.u32 %v1613, 7
    %v1615 = vsub.s32 0, %v1614
    %v1616 = vrot.slane %v1611, %v1615
    %v1618 = vmul.f32 %v1609, %v1616
    %v1619 = vmul.f32 %v1610, %v1616
    %v1620 = vld [vmem:[#allocation17] sm:$0x1]
    %v1622 = vlaneseq
    %v1623 = vshrl.u32 %v1622, 7
    %v1624 = vsub.s32 0, %v1623
    %v1625 = vrot.slane %v1620, %v1624
    %v1627 = vadd.f32 %v1618, %v1625
    %v1628 = vadd.f32 %v1619, %v1625
    %v1629 = vpack.c.bf16 %v1628, %v1627
    %v1630 = vld [vmem:[#allocation22] sm:$0xf]
    %v1631 = vld [vmem:[#allocation22 + $0x4] sm:$0xf]
    %v1632 = vld [vmem:[#allocation22 + $0x8] sm:$0xf]
    %v1633 = vld [vmem:[#allocation22 + $0xc] sm:$0xf]
    %v1634 = vld [vmem:[#allocation23] sm:$0x1]
    %v1636 = vlaneseq
    %v1637 = vshrl.u32 %v1636, 7
    %v1638 = vsub.s32 0, %v1637
    %v1639 = vrot.slane %v1634, %v1638
    %v1645 = vunpack.c.l.b16 %v1630
    %v1646 = vunpack.c.l.b16 %v1631
    %v1647 = vunpack.c.l.b16 %v1632
    %v1648 = vunpack.c.l.b16 %v1633
    %v1649 = vpack.c.b16 %v1646, %v1645
    %v1650 = vpack.c.b16 %v1648, %v1647
    %v1654 = vsel %vm270, %v1629, 0
    %1656 = vmatprep.subr.bf16.mxu0 0
    %1657 = vmatpush1.bf16.msra.mxu0 0
    %1658 = vmatprep.subr.bf16.mxu0 0
    %1659 = vmatpush1.bf16.msra.mxu0 0
    %1660 = vmatprep.subr.bf16.mxu0 0
    %1661 = vmatpush1.bf16.msra.mxu0 0
    %1662 = vmatprep.subr.bf16.mxu0 0
    %1663 = vmatpush1.bf16.msra.mxu0 0
    %1664 = vmatprep.subr.bf16.mxu0 0
    %1665 = vmatpush1.bf16.msra.mxu0 0
    %1666 = vmatprep.subr.bf16.mxu0 0
    %1667 = vmatpush1.bf16.msra.mxu0 0
    %1668 = vmatprep.subr.bf16.mxu0 0
    %1669 = vmatpush1.bf16.msra.mxu0 %v1650
    %1670 = vmatprep.subr.bf16.mxu0 0
    %1671 = vmatpush1.bf16.msra.mxu0 %v1649
    %1672 = vmatprep.subr.bf16.mxu0 0
    %1673 = vmatpush2.bf16.msra.mxu0 0
    %1674 = vmatprep.subr.bf16.mxu0 0
    %1675 = vmatpush2.bf16.msra.mxu0 0
    %1676 = vmatprep.subr.bf16.mxu0 0
    %1677 = vmatpush2.bf16.msra.mxu0 0
    %1678 = vmatprep.subr.bf16.mxu0 0
    %1679 = vmatpush2.bf16.msra.mxu0 0
    %1680 = vmatprep.subr.bf16.mxu0 0
    %1681 = vmatpush2.bf16.msra.mxu0 0
    %1682 = vmatprep.subr.bf16.mxu0 0
    %1683 = vmatpush2.bf16.msra.mxu0 0
    %1684 = vmatprep.subr.bf16.mxu0 0
    %1685 = vmatpush2.bf16.msra.mxu0 0
    %1686 = vmatprep.subr.bf16.mxu0 0
    %1687 = vmatpush2.bf16.msra.mxu0 0
    %1688 = vmatprep.mubr.bf16.mxu0 0
    %1689 = vmatmul.mubr.bf16.gmra.mxu0 %v1654
    %v1690 = vpop.f32.mrf.mxu0
    %v1691 = vadd.f32 %v1639, %v1690
    %v1692 = vpop.f32.mrf.mxu0
    %v1693 = vpop.f32.mrf.mxu0
    %v1694 = vadd.f32 %v1639, %v1693
    %v1695 = vpop.f32.mrf.mxu0
    %1696 = vdwg.mxu0
    %v1697 = vmax.f32 %v1691, 0.0
    %v1698 = vmax.f32 %v1694, 0.0
    %v1699 = vpack.c.bf16 %v1698, %v1697
    %v1700 = vld [vmem:[%s18] sm:$0xf]
    %v1701 = vld [vmem:[%s18 + $0x4] sm:$0xf]
    %v1702 = vld [vmem:[%s18 + $0x8] sm:$0xf]
    %v1703 = vld [vmem:[%s18 + $0xc] sm:$0xf]
    %v1704 = vld [vmem:[%s18 + $0x10] sm:$0xf]
    %v1705 = vld [vmem:[%s18 + $0x14] sm:$0xf]
    %v1706 = vld [vmem:[%s18 + $0x18] sm:$0xf]
    %v1707 = vld [vmem:[%s18 + $0x1c] sm:$0xf]
    %v1708 = vld [vmem:[%s19] sm:$0x1]
    %v1710 = vlaneseq
    %v1711 = vshrl.u32 %v1710, 7
    %v1712 = vsub.s32 0, %v1711
    %v1713 = vrot.slane %v1708, %v1712
    %v1723 = vunpack.c.l.b16 %v1700
    %v1724 = vunpack.c.l.b16 %v1701
    %v1725 = vunpack.c.l.b16 %v1702
    %v1726 = vunpack.c.l.b16 %v1703
    %v1727 = vunpack.c.l.b16 %v1704
    %v1728 = vunpack.c.l.b16 %v1705
    %v1729 = vunpack.c.l.b16 %v1706
    %v1730 = vunpack.c.l.b16 %v1707
    %v1731 = vpack.c.b16 %v1724, %v1723
    %v1732 = vpack.c.b16 %v1726, %v1725
    %v1733 = vpack.c.b16 %v1728, %v1727
    %v1734 = vpack.c.b16 %v1730, %v1729
    %vm1739 = vcmask 523264
    %v1741 = vsel %vm1739, %v1699, 0
    %1743 = vmatprep.subr.bf16.mxu0 0
    %1744 = vmatpush1.bf16.msra.mxu0 0
    %1745 = vmatprep.subr.bf16.mxu0 0
    %1746 = vmatpush1.bf16.msra.mxu0 0
    %1747 = vmatprep.subr.bf16.mxu0 0
    %1748 = vmatpush1.bf16.msra.mxu0 0
    %1749 = vmatprep.subr.bf16.mxu0 0
    %1750 = vmatpush1.bf16.msra.mxu0 0
    %1751 = vmatprep.subr.bf16.mxu0 0
    %1752 = vmatpush1.bf16.msra.mxu0 %v1734
    %1753 = vmatprep.subr.bf16.mxu0 0
    %1754 = vmatpush1.bf16.msra.mxu0 %v1733
    %1755 = vmatprep.subr.bf16.mxu0 0
    %1756 = vmatpush1.bf16.msra.mxu0 %v1732
    %1757 = vmatprep.subr.bf16.mxu0 0
    %1758 = vmatpush1.bf16.msra.mxu0 %v1731
    %1759 = vmatprep.subr.bf16.mxu0 0
    %1760 = vmatpush2.bf16.msra.mxu0 0
    %1761 = vmatprep.subr.bf16.mxu0 0
    %1762 = vmatpush2.bf16.msra.mxu0 0
    %1763 = vmatprep.subr.bf16.mxu0 0
    %1764 = vmatpush2.bf16.msra.mxu0 0
    %1765 = vmatprep.subr.bf16.mxu0 0
    %1766 = vmatpush2.bf16.msra.mxu0 0
    %1767 = vmatprep.subr.bf16.mxu0 0
    %1768 = vmatpush2.bf16.msra.mxu0 0
    %1769 = vmatprep.subr.bf16.mxu0 0
    %1770 = vmatpush2.bf16.msra.mxu0 0
    %1771 = vmatprep.subr.bf16.mxu0 0
    %1772 = vmatpush2.bf16.msra.mxu0 0
    %1773 = vmatprep.subr.bf16.mxu0 0
    %1774 = vmatpush2.bf16.msra.mxu0 0
    %1775 = vmatprep.mubr.bf16.mxu0 0
    %1776 = vmatmul.mubr.bf16.gmra.mxu0 %v1741
    %v1777 = vpop.f32.mrf.mxu0
    %v1778 = vadd.f32 %v1713, %v1777
    %v1779 = vpop.f32.mrf.mxu0
    %v1780 = vpop.f32.mrf.mxu0
    %v1781 = vadd.f32 %v1713, %v1780
    %v1782 = vpop.f32.mrf.mxu0
    %1783 = vdwg.mxu0
    %v1784 = vadd.f32 %v1778, %v1627
    %v1785 = vadd.f32 %v1781, %v1628
    %v1786 = vsel %vm270, %v1784, 0.0
    %1787 = vadd.xlane.f32.xlu0 %v1786
    %v1788 = vpop.xlane.xlu0 %1787
    %v1789 = vsel %vm270, %v1785, 0.0
    %1790 = vadd.xlane.f32.xlu0 %v1789
    %v1791 = vpop.xlane.xlu0 %1790
    %v1792 = vmul.f32 %v1788, %v1590
    %v1793 = vmul.f32 %v1791, %v1590
    %v1794 = vsub.f32 %v1784, %v1792
    %v1795 = vsub.f32 %v1785, %v1793
    %v1796 = vmul.f32 %v1794, %v1794
    %v1797 = vmul.f32 %v1795, %v1795
    %v1798 = vsel %vm270, %v1796, 0.0
    %1799 = vadd.xlane.f32.xlu0 %v1798
    %v1800 = vpop.xlane.xlu0 %1799
    %v1801 = vsel %vm270, %v1797, 0.0
    %1802 = vadd.xlane.f32.xlu0 %v1801
    %v1803 = vpop.xlane.xlu0 %1802
    %v1804 = vmul.f32 %v1800, %v1590
    %v1805 = vmul.f32 %v1803, %v1590
    %v1806 = vadd.f32 %v1804, 1e-05
    %v1807 = vadd.f32 %v1805, 1e-05
    %v1808 = vrsqrt.pop %v1806
    %v1809 = vrsqrt.pop %v1807
    %v1810 = vmul.f32 %v1794, %v1808
    %v1811 = vmul.f32 %v1795, %v1809
    %v1812 = vld [vmem:[#allocation19] sm:$0x1]
    %v1814 = vlaneseq
    %v1815 = vshrl.u32 %v1814, 7
    %v1816 = vsub.s32 0, %v1815
    %v1817 = vrot.slane %v1812, %v1816
    %v1819 = vmul.f32 %v1810, %v1817
    %v1820 = vmul.f32 %v1811, %v1817
    %v1821 = vld [vmem:[#allocation20] sm:$0x1]
    %v1823 = vlaneseq
    %v1824 = vshrl.u32 %v1823, 7
    %v1825 = vsub.s32 0, %v1824
    %v1826 = vrot.slane %v1821, %v1825
    %v1828 = vadd.f32 %v1819, %v1826
    %v1829 = vadd.f32 %v1820, %v1826
    %1831 = vrot.lane.b32.xlu0 %v1829, 32
    %v1832 = vpop.permute.xlu0 %1831
    %v1834 = vsel %vm270, %v1828, %v1832
    %1835 = vst.msk [vmem:[#allocation25] sm:$0xff] %vm1739, %v1834
    // Predicated region
    $region138: #{tpu_custom_call.1} parent=1 // pred_check
      _
    $region139: #{tpu_custom_call.1} parent=1 // pred_check_branch
      %1837 = sbr.rel (0) target = $region141
    $region140: #{tpu_custom_call.1} parent=1 // pred_region
      %s1839 = ssub.s32 128, 128
      %1840 = vsyncadd [#allocation4], %s1839
      %s1842 = sshll.u32 [#allocation25], 4
      %s1843 = int_to_ptr.vmem [resolvable:$true] %s1842
      %1845 = dma.vmem_to_hbm [thread:$0]  %s1843, 128, %s20, [#allocation4]
    $region141: #{tpu_custom_call.1} parent=1 // pred_fallthru
      _
    // Predicated region
    $region142: #{tpu_custom_call.1} parent=1 // pred_check
      _
    $region143: #{tpu_custom_call.1} parent=1 // pred_check_branch
      %1847 = sbr.rel (0) target = $region145
    $region144: #{tpu_custom_call.1} parent=1 // pred_region
      %1848 = dma.done [#allocation4], 128
    $region145: #{tpu_custom_call.1} parent=1 // pred_fallthru
      _
    %1849 = vsyncpa [#allocation3], 1
    %1850 = vsyncpa [#allocation6], 1
    %1851 = vsyncpa [#allocation9], 1
    %1852 = vsyncpa [#allocation12], 1
    %1853 = vsyncpa [#allocation15], 1
    %1854 = vsyncpa [#allocation18], 1
    %1855 = vsyncpa [#allocation21], 1
    %1856 = vsyncpa [#allocation24], 1
    %1857 = vsyncpa [#allocation4], 1

</llo_original>
